<compile_context>
chip_gen: v7x
topology: tpu7x:2x2x1
jax: 0.10.0
libtpu: 0.0.40
codegen_flags: <defaults>
</compile_context>

<pallas_src>
import functools

import jax
import jax.numpy as jnp
from jax.experimental import pallas as pl
from jax.experimental.pallas import tpu as pltpu


# --------------------------------- kernel -----------------------------------
def bottleneck_kernel(x_ref, w1_ref, w2_ref, w3_ref, sb_ref, o_ref, *, H):
    # x_ref : (B*H, W*Cin)      f32   B images stacked along the sublane/M axis
    # w1_ref: (W*Cin, W*P)      bf16  conv1 as block-diagonal matmul
    # w2_ref: (3, W*P, W*P)     bf16  conv2: one banded matrix per ky tap
    #                                 (kx shifts + W zero-pad folded into band)
    # w3_ref: (W*P, W*Cout)     bf16  conv3 as block-diagonal matmul
    # sb_ref: (8, max(W*P,W*Cout)) f32 packed BN scale/bias rows:
    #                                 [s1, b1, s2, b2, s3, b3, 0, 0]
    # o_ref : (B*H, W*Cout)     f32
    BH = x_ref.shape[0]
    WP = w2_ref.shape[1]

    x2d = x_ref[...]                                     # f32, reused for residual

    # ---- conv1 (1x1) + bn1 + relu -------------------------------------------
    h1 = jnp.dot(x2d.astype(jnp.bfloat16), w1_ref[...],
                 preferred_element_type=jnp.float32)
    h1 = jnp.maximum(h1 * sb_ref[0:1, :WP] + sb_ref[1:2, :WP], 0.0)
    # dropout2d: identity (eval mode).

    # ---- conv2 (3x3, stride 1, pad 1) + bn2 + relu ---------------------------
    # ky taps via sublane rolls of h1 (kept in vregs) + image-boundary masks;
    # kx taps / W zero-padding live inside the banded weights.
    row = jax.lax.broadcasted_iota(jnp.int32, (BH, WP), 0) % H
    h1_bf = h1.astype(jnp.bfloat16)
    up = jnp.where(row == 0, 0.0,
                   pltpu.roll(h1, shift=1, axis=0)).astype(jnp.bfloat16)       # row y-1
    dn = jnp.where(row == H - 1, 0.0,
                   pltpu.roll(h1, shift=BH - 1, axis=0)).astype(jnp.bfloat16)  # row y+1
    h2 = jnp.dot(up, w2_ref[0], preferred_element_type=jnp.float32)
    h2 = h2 + jnp.dot(h1_bf, w2_ref[1], preferred_element_type=jnp.float32)
    h2 = h2 + jnp.dot(dn, w2_ref[2], preferred_element_type=jnp.float32)
    h2 = jnp.maximum(h2 * sb_ref[2:3, :WP] + sb_ref[3:4, :WP], 0.0)
    # dropout2d: identity (eval mode).

    # ---- conv3 (1x1) + bn3 + residual + relu ---------------------------------
    h3 = jnp.dot(h2.astype(jnp.bfloat16), w3_ref[...],
                 preferred_element_type=jnp.float32)
    out = jnp.maximum(h3 * sb_ref[4:5, :] + sb_ref[5:6, :] + x2d, 0.0)
    # dropout2d: identity (eval mode).
    o_ref[...] = out


# ---------------------- one-time parameter preprocessing --------------------
def prepare_params(cw1, cw2, cw3, bn1, bn2, bn3, W, eps=1e-5):
    """Fold BN into scale/bias and build block-diagonal / banded matmul
    weights (done once, analogous to a model-load-time layout transform)."""
    planes, inplanes = cw1.shape[0], cw1.shape[1]
    cout = cw3.shape[0]

    w1 = jnp.transpose(cw1[:, :, 0, 0], (1, 0))          # (Cin, P)
    w2 = jnp.transpose(cw2, (2, 3, 1, 0))                # (ky, kx, in, out)
    w3 = jnp.transpose(cw3[:, :, 0, 0], (1, 0))          # (P, Cout)

    def fold(bn):
        gamma, beta, mean, var = bn
        s = gamma / jnp.sqrt(var + eps)
        return s, beta - mean * s

    s1, b1 = fold(bn1)
    s2, b2 = fold(bn2)
    s3, b3 = fold(bn3)

    eye = jnp.eye(W, dtype=jnp.float32)

    # conv1: block-diagonal (W*Cin, W*P).
    w1_blk = jnp.einsum('xz,cp->xczp', eye, w1).reshape(W * inplanes, W * planes)

    # conv2 bands: band[ky][q*P+i, x*P+o] = w2[ky,kx,i,o] where q = x+kx-1
    # (entries with q outside [0,W) are simply absent == zero W-padding).
    xin = jnp.arange(W)[:, None]
    xout = jnp.arange(W)[None, :]
    sel2 = jnp.stack([(xin == xout + dx - 1).astype(jnp.float32)
                      for dx in range(3)])               # (kx, q, x)
    w2_bands = jnp.einsum('kqx,ykio->yqixo', sel2, w2).reshape(
        3, W * planes, W * planes)

    # conv3: block-diagonal (W*P, W*Cout).
    w3_blk = jnp.einsum('xz,po->xpzo', eye, w3).reshape(W * planes, W * cout)

    # Packed BN scale/bias: one (8, L) f32 operand, rows [s1,b1,s2,b2,s3,b3,0,0],
    # each tiled over the W blocks of its lane layout.
    L = max(W * planes, W * cout)
    sb = jnp.zeros((8, L), jnp.float32)
    sb = sb.at[0, :W * planes].set(jnp.tile(s1, W))
    sb = sb.at[1, :W * planes].set(jnp.tile(b1, W))
    sb = sb.at[2, :W * planes].set(jnp.tile(s2, W))
    sb = sb.at[3, :W * planes].set(jnp.tile(b2, W))
    sb = sb.at[4, :W * cout].set(jnp.tile(s3, W))
    sb = sb.at[5, :W * cout].set(jnp.tile(b3, W))

    return (w1_blk.astype(jnp.bfloat16), w2_bands.astype(jnp.bfloat16),
            w3_blk.astype(jnp.bfloat16), sb)


# --------------------------------- wrapper -----------------------------------
def bottleneck_pallas(x_nhwc, params, rows_per_step=128):
    """x_nhwc: (N, H, W, Cin) float32, channels-last. Returns (N, H, W, Cout).

    rows_per_step ~ target MXU M per grid step (128 suits all generations;
    can be raised to 256 on v6e/v7x when N is large enough to keep >=2 steps).
    """
    w1_blk, w2_bands, w3_blk, sb = params
    N, H, W, Cin = x_nhwc.shape
    WCout = w3_blk.shape[1]
    Cout = WCout // W
    assert Cin == Cout, "stride=1 / downsample=None requires Cin == Cout"

    # Images per grid step: target rows_per_step MXU rows, divide N evenly,
    # and keep the grid >= 2 steps when possible (v7x has 2 TensorCores).
    b = max(1, min(N, rows_per_step // H))
    while N % b:
        b -= 1
    if N // b < 2 and b > 1:
        b = max(1, b // 2)
        while N % b:
            b -= 1
    BH = b * H

    x2d = x_nhwc.reshape(N * H, W * Cin)      # contiguous -> free reshape

    out2d = pl.pallas_call(
        functools.partial(bottleneck_kernel, H=H),
        out_shape=jax.ShapeDtypeStruct((N * H, W * Cout), jnp.float32),
        grid_spec=pltpu.PrefetchScalarGridSpec(
            num_scalar_prefetch=0,
            grid=(N // b,),
            in_specs=[
                pl.BlockSpec((BH, W * Cin), lambda n: (n, 0)),
                # Invariant weights / packed scale-bias (tiny; double-buffered
                # by default — irrelevant at ~100 KiB total).
                pl.BlockSpec(w1_blk.shape, lambda n: (0, 0)),
                pl.BlockSpec(w2_bands.shape, lambda n: (0, 0, 0)),
                pl.BlockSpec(w3_blk.shape, lambda n: (0, 0)),
                pl.BlockSpec(sb.shape, lambda n: (0, 0)),
            ],
            out_specs=pl.BlockSpec((BH, W * Cout), lambda n: (n, 0)),
        ),
        compiler_params=pltpu.CompilerParams(
            dimension_semantics=("parallel",)),   # megacore-shard the batch
    )(x2d, w1_blk, w2_bands, w3_blk, sb)

    return out2d.reshape(N, H, W, Cout)


# ---------------------------- plain-JAX reference ----------------------------
def bottleneck_ref(x_nhwc, cw1, cw2, cw3, bn1, bn2, bn3, eps=1e-5):
    dn = ('NHWC', 'HWIO', 'NHWC')
    k1 = jnp.transpose(cw1, (2, 3, 1, 0))    # OIHW -> HWIO
    k2 = jnp.transpose(cw2, (2, 3, 1, 0))
    k3 = jnp.transpose(cw3, (2, 3, 1, 0))

    def bn(y, p):
        gamma, beta, mean, var = p
        inv = gamma / jnp.sqrt(var + eps)
        return (y - mean) * inv + beta

    out = jax.lax.conv_general_dilated(x_nhwc, k1, (1, 1), 'VALID',
                                       dimension_numbers=dn)
    out = jnp.maximum(bn(out, bn1), 0.0)
    out = jax.lax.conv_general_dilated(out, k2, (1, 1), ((1, 1), (1, 1)),
                                       dimension_numbers=dn)
    out = jnp.maximum(bn(out, bn2), 0.0)
    out = jax.lax.conv_general_dilated(out, k3, (1, 1), 'VALID',
                                       dimension_numbers=dn)
    out = bn(out, bn3)
    return jnp.maximum(out + x_nhwc, 0.0)


if __name__ == "__main__":
    # Bottleneck(inplanes=16, planes=4, stride=1, downsample=None), eval mode.
    # N=16 so each grid step batches 8 images (M = 8*16 = 128) and the grid
    # still has 2 steps (v7x megacore / pipelining).
    N, H, W = 16, 16, 16
    planes = 4
    inplanes = planes * 4            # expansion=4, no downsample => Cin == Cout
    cout = planes * 4

    key = jax.random.PRNGKey(0)
    keys = jax.random.split(key, 16)

    x = jax.random.normal(keys[0], (N, H, W, inplanes), dtype=jnp.float32)  # NHWC

    # Conv weights in PyTorch OIHW layout.
    cw1 = jax.random.normal(keys[1], (planes, inplanes, 1, 1), jnp.float32) * 0.2
    cw2 = jax.random.normal(keys[2], (planes, planes, 3, 3), jnp.float32) * 0.2
    cw3 = jax.random.normal(keys[3], (cout, planes, 1, 1), jnp.float32) * 0.2

    def bn_params(kg, kb, km, kv, c):
        gamma = 0.5 + jax.random.uniform(kg, (c,), jnp.float32)
        beta = 0.1 * jax.random.normal(kb, (c,), jnp.float32)
        mean = 0.1 * jax.random.normal(km, (c,), jnp.float32)
        var = 0.5 + jax.random.uniform(kv, (c,), jnp.float32)
        return gamma, beta, mean, var

    bn1 = bn_params(keys[4], keys[5], keys[6], keys[7], planes)
    bn2 = bn_params(keys[8], keys[9], keys[10], keys[11], planes)
    bn3 = bn_params(keys[12], keys[13], keys[14], keys[15], cout)

    params = prepare_params(cw1, cw2, cw3, bn1, bn2, bn3, W)

    run = jax.jit(bottleneck_pallas)
    out = run(x, params)
    out = jax.block_until_ready(out)

    ref = bottleneck_ref(x, cw1, cw2, cw3, bn1, bn2, bn3)
    assert out.shape == (N, H, W, cout)
    # bf16 MXU operands (f32 accumulation / epilogue) -> slightly looser tol.
    max_err = float(jnp.max(jnp.abs(out - ref)))
    assert jnp.allclose(out, ref, atol=2e-2, rtol=2e-2), \
        f"max abs err = {max_err}"

    print("KERNEL_OK")
</pallas_src>

<mosaic_0001>
module attributes {stable_mosaic.version = 11 : i64} {
  func.func @bottleneck_kernel(%arg0: i32, %arg1: memref<128x256xf32, #tpu.memory_space<vmem>>, %arg2: memref<256x64xbf16, #tpu.memory_space<vmem>>, %arg3: memref<3x64x64xbf16, #tpu.memory_space<vmem>>, %arg4: memref<64x256xbf16, #tpu.memory_space<vmem>>, %arg5: memref<8x256xf32, #tpu.memory_space<vmem>>, %arg6: memref<128x256xf32, #tpu.memory_space<vmem>>) attributes {dimension_semantics = [#tpu.dimension_semantics<parallel>], iteration_bounds = array<i64: 2>, scalar_prefetch = 0 : i64, scratch_operands = 0 : i64, tpu.core_type = #tpu.core_type<tc>, window_params = [{transform_indices = @transform_0, window_bounds = array<i64: 128, 256>}, {pipeline_mode = #tpu.pipeline_mode<synchronous>, transform_indices = @transform_1, window_bounds = array<i64: 256, 64>}, {pipeline_mode = #tpu.pipeline_mode<synchronous>, transform_indices = @transform_2, window_bounds = array<i64: 3, 64, 64>}, {pipeline_mode = #tpu.pipeline_mode<synchronous>, transform_indices = @transform_3, window_bounds = array<i64: 64, 256>}, {pipeline_mode = #tpu.pipeline_mode<synchronous>, transform_indices = @transform_4, window_bounds = array<i64: 8, 256>}, {transform_indices = @transform_5, window_bounds = array<i64: 128, 256>}]} {
    %c0 = arith.constant 0 : index
    %c0_0 = arith.constant 0 : index
    %0 = vector.load %arg1[%c0, %c0_0] : memref<128x256xf32, #tpu.memory_space<vmem>>, vector<128x256xf32>
    %1 = arith.truncf %0 : vector<128x256xf32> to vector<128x256xbf16>
    %c0_1 = arith.constant 0 : index
    %c0_2 = arith.constant 0 : index
    %2 = vector.load %arg2[%c0_1, %c0_2] : memref<256x64xbf16, #tpu.memory_space<vmem>>, vector<256x64xbf16>
    %cst = arith.constant dense<0.000000e+00> : vector<128x64xf32>
    %3 = tpu.matmul %1, %2, %cst {dimension_numbers = #tpu.dot_dimension_numbers<[1], [0], [0], [1], [0, 0, 1, 1], [], []>} : vector<128x256xbf16>, vector<256x64xbf16>, vector<128x64xf32> -> vector<128x64xf32>
    %c0_3 = arith.constant 0 : index
    %c0_4 = arith.constant 0 : index
    %4 = vector.load %arg5[%c0_3, %c0_4] : memref<8x256xf32, #tpu.memory_space<vmem>>, vector<1x64xf32>
    %5 = vector.broadcast %4 : vector<1x64xf32> to vector<128x64xf32>
    %6 = arith.mulf %3, %5 : vector<128x64xf32>
    %c1 = arith.constant 1 : index
    %c0_5 = arith.constant 0 : index
    %7 = vector.load %arg5[%c1, %c0_5] : memref<8x256xf32, #tpu.memory_space<vmem>>, vector<1x64xf32>
    %8 = vector.broadcast %7 : vector<1x64xf32> to vector<128x64xf32>
    %9 = arith.addf %6, %8 : vector<128x64xf32>
    %cst_6 = arith.constant 0.000000e+00 : f32
    %10 = vector.broadcast %cst_6 : f32 to vector<128x64xf32>
    %11 = arith.maximumf %9, %10 : vector<128x64xf32>
    %12 = tpu.iota {dimensions = array<i32: 0>} : vector<128x64xi32>
    %c16_i32 = arith.constant 16 : i32
    %c0_i32 = arith.constant 0 : i32
    %13 = arith.cmpi eq, %c16_i32, %c0_i32 : i32
    %c1_i32 = arith.constant 1 : i32
    %14 = arith.select %13, %c1_i32, %c16_i32 : i32
    %15 = vector.broadcast %14 : i32 to vector<128x64xi32>
    %16 = arith.remsi %12, %15 : vector<128x64xi32>
    %c0_i32_7 = arith.constant 0 : i32
    %17 = vector.broadcast %c0_i32_7 : i32 to vector<128x64xi32>
    %18 = arith.cmpi ne, %16, %17 : vector<128x64xi32>
    %c0_i32_8 = arith.constant 0 : i32
    %19 = vector.broadcast %c0_i32_8 : i32 to vector<128x64xi32>
    %20 = arith.cmpi slt, %16, %19 : vector<128x64xi32>
    %c0_i32_9 = arith.constant 0 : i32
    %21 = arith.cmpi slt, %14, %c0_i32_9 : i32
    %22 = vector.broadcast %21 : i1 to vector<128x64xi1>
    %23 = vector.broadcast %22 : vector<128x64xi1> to vector<128x64xi1>
    %24 = arith.xori %20, %23 : vector<128x64xi1>
    %25 = arith.andi %24, %18 : vector<128x64xi1>
    %26 = vector.broadcast %14 : i32 to vector<128x64xi32>
    %27 = arith.addi %16, %26 : vector<128x64xi32>
    %28 = arith.select %25, %27, %16 : vector<128x64xi1>, vector<128x64xi32>
    %29 = arith.truncf %11 : vector<128x64xf32> to vector<128x64xbf16>
    %c0_i32_10 = arith.constant 0 : i32
    %30 = vector.broadcast %c0_i32_10 : i32 to vector<128x64xi32>
    %31 = arith.cmpi eq, %28, %30 : vector<128x64xi32>
    %c1_i32_11 = arith.constant 1 : i32
    %32 = tpu.dynamic_rotate %11 by %c1_i32_11 dim 0 : vector<128x64xf32>, i32 -> vector<128x64xf32>
    %cst_12 = arith.constant 0.000000e+00 : f32
    %33 = vector.broadcast %cst_12 : f32 to vector<128x64xf32>
    %34 = arith.select %31, %33, %32 : vector<128x64xi1>, vector<128x64xf32>
    %35 = arith.truncf %34 : vector<128x64xf32> to vector<128x64xbf16>
    %c15_i32 = arith.constant 15 : i32
    %36 = vector.broadcast %c15_i32 : i32 to vector<128x64xi32>
    %37 = arith.cmpi eq, %28, %36 : vector<128x64xi32>
    %c127_i32 = arith.constant 127 : i32
    %38 = tpu.dynamic_rotate %11 by %c127_i32 dim 0 : vector<128x64xf32>, i32 -> vector<128x64xf32>
    %cst_13 = arith.constant 0.000000e+00 : f32
    %39 = vector.broadcast %cst_13 : f32 to vector<128x64xf32>
    %40 = arith.select %37, %39, %38 : vector<128x64xi1>, vector<128x64xf32>
    %41 = arith.truncf %40 : vector<128x64xf32> to vector<128x64xbf16>
    %c0_14 = arith.constant 0 : index
    %c0_15 = arith.constant 0 : index
    %c0_16 = arith.constant 0 : index
    %42 = vector.load %arg3[%c0_14, %c0_15, %c0_16] : memref<3x64x64xbf16, #tpu.memory_space<vmem>>, vector<1x64x64xbf16>
    %43 = vector.shape_cast %42 : vector<1x64x64xbf16> to vector<64x64xbf16>
    %cst_17 = arith.constant dense<0.000000e+00> : vector<128x64xf32>
    %44 = tpu.matmul %35, %43, %cst_17 {dimension_numbers = #tpu.dot_dimension_numbers<[1], [0], [0], [1], [0, 0, 1, 1], [], []>} : vector<128x64xbf16>, vector<64x64xbf16>, vector<128x64xf32> -> vector<128x64xf32>
    %c1_18 = arith.constant 1 : index
    %c0_19 = arith.constant 0 : index
    %c0_20 = arith.constant 0 : index
    %45 = vector.load %arg3[%c1_18, %c0_19, %c0_20] : memref<3x64x64xbf16, #tpu.memory_space<vmem>>, vector<1x64x64xbf16>
    %46 = vector.shape_cast %45 : vector<1x64x64xbf16> to vector<64x64xbf16>
    %cst_21 = arith.constant dense<0.000000e+00> : vector<128x64xf32>
    %47 = tpu.matmul %29, %46, %cst_21 {dimension_numbers = #tpu.dot_dimension_numbers<[1], [0], [0], [1], [0, 0, 1, 1], [], []>} : vector<128x64xbf16>, vector<64x64xbf16>, vector<128x64xf32> -> vector<128x64xf32>
    %48 = arith.addf %44, %47 : vector<128x64xf32>
    %c2 = arith.constant 2 : index
    %c0_22 = arith.constant 0 : index
    %c0_23 = arith.constant 0 : index
    %49 = vector.load %arg3[%c2, %c0_22, %c0_23] : memref<3x64x64xbf16, #tpu.memory_space<vmem>>, vector<1x64x64xbf16>
    %50 = vector.shape_cast %49 : vector<1x64x64xbf16> to vector<64x64xbf16>
    %cst_24 = arith.constant dense<0.000000e+00> : vector<128x64xf32>
    %51 = tpu.matmul %41, %50, %cst_24 {dimension_numbers = #tpu.dot_dimension_numbers<[1], [0], [0], [1], [0, 0, 1, 1], [], []>} : vector<128x64xbf16>, vector<64x64xbf16>, vector<128x64xf32> -> vector<128x64xf32>
    %52 = arith.addf %48, %51 : vector<128x64xf32>
    %c2_25 = arith.constant 2 : index
    %c0_26 = arith.constant 0 : index
    %53 = vector.load %arg5[%c2_25, %c0_26] : memref<8x256xf32, #tpu.memory_space<vmem>>, vector<1x64xf32>
    %54 = vector.broadcast %53 : vector<1x64xf32> to vector<128x64xf32>
    %55 = arith.mulf %52, %54 : vector<128x64xf32>
    %c3 = arith.constant 3 : index
    %c0_27 = arith.constant 0 : index
    %56 = vector.load %arg5[%c3, %c0_27] : memref<8x256xf32, #tpu.memory_space<vmem>>, vector<1x64xf32>
    %57 = vector.broadcast %56 : vector<1x64xf32> to vector<128x64xf32>
    %58 = arith.addf %55, %57 : vector<128x64xf32>
    %cst_28 = arith.constant 0.000000e+00 : f32
    %59 = vector.broadcast %cst_28 : f32 to vector<128x64xf32>
    %60 = arith.maximumf %58, %59 : vector<128x64xf32>
    %61 = arith.truncf %60 : vector<128x64xf32> to vector<128x64xbf16>
    %c0_29 = arith.constant 0 : index
    %c0_30 = arith.constant 0 : index
    %62 = vector.load %arg4[%c0_29, %c0_30] : memref<64x256xbf16, #tpu.memory_space<vmem>>, vector<64x256xbf16>
    %cst_31 = arith.constant dense<0.000000e+00> : vector<128x256xf32>
    %63 = tpu.matmul %61, %62, %cst_31 {dimension_numbers = #tpu.dot_dimension_numbers<[1], [0], [0], [1], [0, 0, 1, 1], [], []>} : vector<128x64xbf16>, vector<64x256xbf16>, vector<128x256xf32> -> vector<128x256xf32>
    %c4 = arith.constant 4 : index
    %c0_32 = arith.constant 0 : index
    %64 = vector.load %arg5[%c4, %c0_32] : memref<8x256xf32, #tpu.memory_space<vmem>>, vector<1x256xf32>
    %65 = vector.broadcast %64 : vector<1x256xf32> to vector<128x256xf32>
    %66 = arith.mulf %63, %65 : vector<128x256xf32>
    %c5 = arith.constant 5 : index
    %c0_33 = arith.constant 0 : index
    %67 = vector.load %arg5[%c5, %c0_33] : memref<8x256xf32, #tpu.memory_space<vmem>>, vector<1x256xf32>
    %68 = vector.broadcast %67 : vector<1x256xf32> to vector<128x256xf32>
    %69 = arith.addf %66, %68 : vector<128x256xf32>
    %70 = arith.addf %69, %0 : vector<128x256xf32>
    %cst_34 = arith.constant 0.000000e+00 : f32
    %71 = vector.broadcast %cst_34 : f32 to vector<128x256xf32>
    %72 = arith.maximumf %70, %71 : vector<128x256xf32>
    %c0_35 = arith.constant 0 : index
    %c0_36 = arith.constant 0 : index
    %73 = vector.load %arg6[%c0_35, %c0_36] : memref<128x256xf32, #tpu.memory_space<vmem>>, vector<128x256xf32>
    tpu.vector_store %arg6[%c0_35, %c0_36], %72 {strides = array<i32>} : memref<128x256xf32, #tpu.memory_space<vmem>>, vector<128x256xf32>,
    return
  }
  func.func @transform_0(%arg0: i32) -> (i32, i32) {
    %c0_i32 = arith.constant 0 : i32
    %c0_i32_0 = arith.constant 0 : i32
    return %arg0, %c0_i32 : i32, i32
  }
  func.func @transform_1(%arg0: i32) -> (i32, i32) {
    %c0_i32 = arith.constant 0 : i32
    %c0_i32_0 = arith.constant 0 : i32
    %c0_i32_1 = arith.constant 0 : i32
    return %c0_i32, %c0_i32_0 : i32, i32
  }
  func.func @transform_2(%arg0: i32) -> (i32, i32, i32) {
    %c0_i32 = arith.constant 0 : i32
    %c0_i32_0 = arith.constant 0 : i32
    %c0_i32_1 = arith.constant 0 : i32
    %c0_i32_2 = arith.constant 0 : i32
    return %c0_i32, %c0_i32_0, %c0_i32_1 : i32, i32, i32
  }
  func.func @transform_3(%arg0: i32) -> (i32, i32) {
    %c0_i32 = arith.constant 0 : i32
    %c0_i32_0 = arith.constant 0 : i32
    %c0_i32_1 = arith.constant 0 : i32
    return %c0_i32, %c0_i32_0 : i32, i32
  }
  func.func @transform_4(%arg0: i32) -> (i32, i32) {
    %c0_i32 = arith.constant 0 : i32
    %c0_i32_0 = arith.constant 0 : i32
    %c0_i32_1 = arith.constant 0 : i32
    return %c0_i32, %c0_i32_0 : i32, i32
  }
  func.func @transform_5(%arg0: i32) -> (i32, i32) {
    %c0_i32 = arith.constant 0 : i32
    %c0_i32_0 = arith.constant 0 : i32
    return %arg0, %c0_i32 : i32, i32
  }
}

</mosaic_0001>

<llo_original>
// kernel: bottleneck_pallas.1
$region0: #{bottleneck_pallas.1}
  #allocation0 [shape = 'u32[]', space=smem, size = 0x4, offset = 0x4, fixed_abs, tag = 'smem constant byte address 0x4 - core index']
  #allocation1 [shape = 'u32[144,128]{1,0:T(1,128)}', space=vmem, size = 0x12000, scoped, tag = 'internal scratch']
  %s0 = inlined_call_operand.vmem [shape: f32[256,256], index: 0, kind: input, shape index: {}]
  %s1 = inlined_call_operand.vmem [shape: bf16[256,64], index: 1, kind: input, shape index: {}]
  %s2 = inlined_call_operand.vmem [shape: bf16[3,64,64], index: 2, kind: input, shape index: {}]
  %s3 = inlined_call_operand.vmem [shape: bf16[64,256], index: 3, kind: input, shape index: {}]
  %s4 = inlined_call_operand.vmem [shape: f32[8,256], index: 4, kind: input, shape index: {}]
  %s5 = inlined_call_operand.vmem [shape: f32[256,256], index: 5, kind: output, shape index: {}]
  %s6 = sld [smem:[#allocation0]]
  $region53: #{bottleneck_pallas.1} parent=0
    _
  %s8 = ssub.s32 1, %s6
  %s9 = scalar_select 0, %s8, %s6
  loop: start=0, step=1, limit=4
  $region2: #{bottleneck_pallas.1} parent=0 // loop_pre_header
    _
  $region3: #{bottleneck_pallas.1} parent=0 // loop_header
    %s11 = sphi 0, %s15
    %p12 = scmp.ge.s32.totalorder %s11, 4
    %s21 = sphi 0, %s23
    %s24 = sphi 0, %s21
    %s25 = sphi 0, %s24
    %s41 = sphi 0, %s25
    %s45 = sphi 0, %s45
    %s47 = sphi 0, %s45
    %s48 = sphi 0, %s47
    %s62 = sphi 0, %s48
    %s66 = sphi 0, %s66
    %s68 = sphi 0, %s66
    %s69 = sphi 0, %s68
    %s83 = sphi 0, %s69
    %s87 = sphi 0, %s87
    %s89 = sphi 0, %s87
    %s90 = sphi 0, %s89
    %s104 = sphi 0, %s90
    %s108 = sphi 0, %s108
    %s110 = sphi 0, %s108
    %s111 = sphi 0, %s110
    %s125 = sphi 0, %s111
    %s131 = sphi 0, %s133
    %s134 = sphi 0, %s131
    %s135 = sphi 0, %s134
    %s151 = sphi 0, %s135
  $region4: #{bottleneck_pallas.1} parent=0 // loop_header_branch
    %14 = sbr.rel (%p12) target = $region8
  $region5: #{bottleneck_pallas.1} parent=0 // loop_body
    %s16 = ssub.s32 %s11, 1
    %s17 = ssub.s32 %s11, 2
    %s18 = sadd.s32 %s11, 1
    %s19 = ssub.s32 %s11, %s18
    %p20 = scmp.eq.s32.totalorder %s19, 0
    %s22 = sadd.s32 %s21, 1
    %s23 = scalar_select %p20, %s21, %s22
    %p26 = pneg %p20
    %p27 = scmp.eq.s32.totalorder %s11, 1
    %p28 = por %p26, %p27
    %p29 = scmp.ne.s32.totalorder %s21, %s24
    %p30 = scmp.eq.s32.totalorder %s11, 0
    %p31 = por %p29, %p30
    %p32 = scmp.ne.s32.totalorder %s21, %s24
    %p33 = scmp.eq.s32.totalorder %s16, 1
    %p34 = por %p32, %p33
    %p35 = scmp.ne.s32.totalorder %s24, %s25
    %p36 = scmp.eq.s32.totalorder %s16, 0
    %p37 = por %p35, %p36
    %p38 = scmp.ne.s32.totalorder %s24, %s25
    %p39 = scmp.eq.s32.totalorder %s17, 1
    %p40 = por %p38, %p39
    %p42 = scmp.ne.s32.totalorder %s25, %s41
    %p43 = scmp.eq.s32.totalorder %s17, 0
    %p44 = por %p42, %p43
    %s46 = sadd.s32 %s45, 1
    %p49 = scmp.eq.s32.totalorder %s11, 1
    %p50 = scmp.ne.s32.totalorder %s45, %s47
    %p51 = scmp.eq.s32.totalorder %s11, 0
    %p52 = por %p50, %p51
    %p53 = scmp.ne.s32.totalorder %s45, %s47
    %p54 = scmp.eq.s32.totalorder %s16, 1
    %p55 = por %p53, %p54
    %p56 = scmp.ne.s32.totalorder %s47, %s48
    %p57 = scmp.eq.s32.totalorder %s16, 0
    %p58 = por %p56, %p57
    %p59 = scmp.ne.s32.totalorder %s47, %s48
    %p60 = scmp.eq.s32.totalorder %s17, 1
    %p61 = por %p59, %p60
    %p63 = scmp.ne.s32.totalorder %s48, %s62
    %p64 = scmp.eq.s32.totalorder %s17, 0
    %p65 = por %p63, %p64
    %s67 = sadd.s32 %s66, 1
    %p70 = scmp.eq.s32.totalorder %s11, 1
    %p71 = scmp.ne.s32.totalorder %s66, %s68
    %p72 = scmp.eq.s32.totalorder %s11, 0
    %p73 = por %p71, %p72
    %p74 = scmp.ne.s32.totalorder %s66, %s68
    %p75 = scmp.eq.s32.totalorder %s16, 1
    %p76 = por %p74, %p75
    %p77 = scmp.ne.s32.totalorder %s68, %s69
    %p78 = scmp.eq.s32.totalorder %s16, 0
    %p79 = por %p77, %p78
    %p80 = scmp.ne.s32.totalorder %s68, %s69
    %p81 = scmp.eq.s32.totalorder %s17, 1
    %p82 = por %p80, %p81
    %p84 = scmp.ne.s32.totalorder %s69, %s83
    %p85 = scmp.eq.s32.totalorder %s17, 0
    %p86 = por %p84, %p85
    %s88 = sadd.s32 %s87, 1
    %p91 = scmp.eq.s32.totalorder %s11, 1
    %p92 = scmp.ne.s32.totalorder %s87, %s89
    %p93 = scmp.eq.s32.totalorder %s11, 0
    %p94 = por %p92, %p93
    %p95 = scmp.ne.s32.totalorder %s87, %s89
    %p96 = scmp.eq.s32.totalorder %s16, 1
    %p97 = por %p95, %p96
    %p98 = scmp.ne.s32.totalorder %s89, %s90
    %p99 = scmp.eq.s32.totalorder %s16, 0
    %p100 = por %p98, %p99
    %p101 = scmp.ne.s32.totalorder %s89, %s90
    %p102 = scmp.eq.s32.totalorder %s17, 1
    %p103 = por %p101, %p102
    %p105 = scmp.ne.s32.totalorder %s90, %s104
    %p106 = scmp.eq.s32.totalorder %s17, 0
    %p107 = por %p105, %p106
    %s109 = sadd.s32 %s108, 1
    %p112 = scmp.eq.s32.totalorder %s11, 1
    %p113 = scmp.ne.s32.totalorder %s108, %s110
    %p114 = scmp.eq.s32.totalorder %s11, 0
    %p115 = por %p113, %p114
    %p116 = scmp.ne.s32.totalorder %s108, %s110
    %p117 = scmp.eq.s32.totalorder %s16, 1
    %p118 = por %p116, %p117
    %p119 = scmp.ne.s32.totalorder %s110, %s111
    %p120 = scmp.eq.s32.totalorder %s16, 0
    %p121 = por %p119, %p120
    %p122 = scmp.ne.s32.totalorder %s110, %s111
    %p123 = scmp.eq.s32.totalorder %s17, 1
    %p124 = por %p122, %p123
    %p126 = scmp.ne.s32.totalorder %s111, %s125
    %p127 = scmp.eq.s32.totalorder %s17, 0
    %p128 = por %p126, %p127
    %s129 = ssub.s32 %s11, %s18
    %p130 = scmp.eq.s32.totalorder %s129, 0
    %s132 = sadd.s32 %s131, 1
    %s133 = scalar_select %p130, %s131, %s132
    %p136 = pneg %p130
    %p137 = scmp.eq.s32.totalorder %s11, 1
    %p138 = por %p136, %p137
    %p139 = scmp.ne.s32.totalorder %s131, %s134
    %p140 = scmp.eq.s32.totalorder %s11, 0
    %p141 = por %p139, %p140
    %p142 = scmp.ne.s32.totalorder %s131, %s134
    %p143 = scmp.eq.s32.totalorder %s16, 1
    %p144 = por %p142, %p143
    %p145 = scmp.ne.s32.totalorder %s134, %s135
    %p146 = scmp.eq.s32.totalorder %s16, 0
    %p147 = por %p145, %p146
    %p148 = scmp.ne.s32.totalorder %s134, %s135
    %p149 = scmp.eq.s32.totalorder %s17, 1
    %p150 = por %p148, %p149
    %p152 = scmp.ne.s32.totalorder %s135, %s151
    %p153 = scmp.eq.s32.totalorder %s17, 0
    %p154 = por %p152, %p153
    %p155 = scmp.le.s32.totalorder 1, %s11
    %p156 = scmp.lt.s32.totalorder %s11, 3
    %p157 = pnand %p155, %p156
    %p158 = pneg %p157
    // Predicated region
    $region9: #{bottleneck_pallas.1} parent=5 // pred_check
      _
    $region10: #{bottleneck_pallas.1} parent=5 // pred_check_branch
      %160 = sbr.rel (%p157) target = $region12
    $region11: #{bottleneck_pallas.1} parent=5 // pred_region
      %s161 = ssub.s32 %s11, 1
      // Predicated region
      $region13: #{bottleneck_pallas.1} parent=11 // pred_check
        %p162 = pneg %p58
      $region14: #{bottleneck_pallas.1} parent=11 // pred_check_branch
        %164 = sbr.rel (%p162) target = $region16
      $region15: #{bottleneck_pallas.1} parent=11 // pred_region
        _
      $region16: #{bottleneck_pallas.1} parent=11 // pred_fallthru
        _
      // Predicated region
      $region17: #{bottleneck_pallas.1} parent=11 // pred_check
        %p165 = pneg %p79
      $region18: #{bottleneck_pallas.1} parent=11 // pred_check_branch
        %167 = sbr.rel (%p165) target = $region20
      $region19: #{bottleneck_pallas.1} parent=11 // pred_region
        _
      $region20: #{bottleneck_pallas.1} parent=11 // pred_fallthru
        _
      // Predicated region
      $region21: #{bottleneck_pallas.1} parent=11 // pred_check
        %p168 = pneg %p100
      $region22: #{bottleneck_pallas.1} parent=11 // pred_check_branch
        %170 = sbr.rel (%p168) target = $region24
      $region23: #{bottleneck_pallas.1} parent=11 // pred_region
        _
      $region24: #{bottleneck_pallas.1} parent=11 // pred_fallthru
        _
      // Predicated region
      $region25: #{bottleneck_pallas.1} parent=11 // pred_check
        %p171 = pneg %p121
      $region26: #{bottleneck_pallas.1} parent=11 // pred_check_branch
        %173 = sbr.rel (%p171) target = $region28
      $region27: #{bottleneck_pallas.1} parent=11 // pred_region
        _
      $region28: #{bottleneck_pallas.1} parent=11 // pred_fallthru
        _
    $region12: #{bottleneck_pallas.1} parent=5 // pred_fallthru
      _
    %p174 = scmp.lt.s32.totalorder %s11, 2
    // Predicated region
    $region29: #{bottleneck_pallas.1} parent=5 // pred_check
      %p175 = pneg %p174
    $region30: #{bottleneck_pallas.1} parent=5 // pred_check_branch
      %177 = sbr.rel (%p175) target = $region32
    $region31: #{bottleneck_pallas.1} parent=5 // pred_region
      // Predicated region
      $region33: #{bottleneck_pallas.1} parent=31 // pred_check
        %p178 = pneg %p31
      $region34: #{bottleneck_pallas.1} parent=31 // pred_check_branch
        %180 = sbr.rel (%p178) target = $region36
      $region35: #{bottleneck_pallas.1} parent=31 // pred_region
        %s181 = smul.u32 16, %s11
        %p182 = scmp.lt.s32.totalorder %s181, 31
        %s183 = scalar_select %p182, %s181, 31
        %s184 = smul.addr %s183, 2
        %s185 = smul.addr %s184, 8
        %s186 = scalar_lea.vmem %s0, %s185
        %s187 = smul.u32 16, %s11
      $region36: #{bottleneck_pallas.1} parent=31 // pred_fallthru
        _
    $region32: #{bottleneck_pallas.1} parent=5 // pred_fallthru
      _
    %p188 = scmp.le.s32.totalorder 1, %s11
    %p189 = scmp.lt.s32.totalorder %s11, 3
    %p190 = pnand %p188, %p189
    %p191 = pneg %p190
    // Predicated region
    $region37: #{bottleneck_pallas.1} parent=5 // pred_check
      _
    $region38: #{bottleneck_pallas.1} parent=5 // pred_check_branch
      %193 = sbr.rel (%p190) target = $region40
    $region39: #{bottleneck_pallas.1} parent=5 // pred_region
      %s194 = ssub.s32 %s11, 1
      %s195 = smul.u32 16, %s16
      %p196 = scmp.lt.s32.totalorder %s195, 31
      %s197 = scalar_select %p196, %s195, 31
      %s198 = smul.addr %s197, 2
      %s199 = smul.addr %s198, 8
      %s200 = scalar_lea.vmem %s0, %s199
      %p201 = pneg %p37
      %p202 = pneg %p34
      %p203 = pneg %p58
      %p204 = pneg %p55
      %p205 = pneg %p79
      %p206 = pneg %p76
      %p207 = pneg %p100
      %p208 = pneg %p97
      %p209 = pneg %p121
      %p210 = pneg %p118
      %p211 = pneg %p147
      %p212 = pneg %p144
      %s213 = smul.u32 16, %s16
      %p214 = scmp.lt.s32.totalorder %s213, 31
      %s215 = scalar_select %p214, %s213, 31
      %s216 = smul.addr %s215, 2
      %s217 = smul.addr %s216, 8
      %s218 = scalar_lea.vmem %s5, %s217
      %s219 = smul.u32 16, %s16
      %p220 = scmp.lt.s32.totalorder %s219, 31
      %s221 = scalar_select %p220, %s219, 31
      %s222 = smul.addr %s221, 2
      %s223 = smul.addr %s222, 8
      %s224 = scalar_lea.vmem %s0, %s223
      %s225 = smul.u32 16, %s16
      %s226 = smul.u32 16, %s16
      %p227 = scmp.lt.s32.totalorder %s226, 31
      %s228 = scalar_select %p227, %s226, 31
      %s229 = smul.addr %s228, 2
      %s230 = smul.addr %s229, 8
      %s231 = scalar_lea.vmem %s5, %s230
      %s232 = smul.u32 16, %s16
      %v234 = vld [vmem:[%s224] sm:$0xff]
      %v235 = vld [vmem:[%s224 + $0x8] sm:$0xff]
      %v236 = vld [vmem:[%s224 + $0x10] sm:$0xff]
      %v237 = vld [vmem:[%s224 + $0x18] sm:$0xff]
      %v238 = vld [vmem:[%s224 + $0x20] sm:$0xff]
      %v239 = vld [vmem:[%s224 + $0x28] sm:$0xff]
      %v240 = vld [vmem:[%s224 + $0x30] sm:$0xff]
      %v241 = vld [vmem:[%s224 + $0x38] sm:$0xff]
      %v242 = vld [vmem:[%s224 + $0x40] sm:$0xff]
      %v243 = vld [vmem:[%s224 + $0x48] sm:$0xff]
      %v244 = vld [vmem:[%s224 + $0x50] sm:$0xff]
      %v245 = vld [vmem:[%s224 + $0x58] sm:$0xff]
      %v246 = vld [vmem:[%s224 + $0x60] sm:$0xff]
      %v247 = vld [vmem:[%s224 + $0x68] sm:$0xff]
      %v248 = vld [vmem:[%s224 + $0x70] sm:$0xff]
      %v249 = vld [vmem:[%s224 + $0x78] sm:$0xff]
      %v250 = vld [vmem:[%s224 + $0x80] sm:$0xff]
      %v251 = vld [vmem:[%s224 + $0x88] sm:$0xff]
      %v252 = vld [vmem:[%s224 + $0x90] sm:$0xff]
      %v253 = vld [vmem:[%s224 + $0x98] sm:$0xff]
      %v254 = vld [vmem:[%s224 + $0xa0] sm:$0xff]
      %v255 = vld [vmem:[%s224 + $0xa8] sm:$0xff]
      %v256 = vld [vmem:[%s224 + $0xb0] sm:$0xff]
      %v257 = vld [vmem:[%s224 + $0xb8] sm:$0xff]
      %v258 = vld [vmem:[%s224 + $0xc0] sm:$0xff]
      %v259 = vld [vmem:[%s224 + $0xc8] sm:$0xff]
      %v260 = vld [vmem:[%s224 + $0xd0] sm:$0xff]
      %v261 = vld [vmem:[%s224 + $0xd8] sm:$0xff]
      %v262 = vld [vmem:[%s224 + $0xe0] sm:$0xff]
      %v263 = vld [vmem:[%s224 + $0xe8] sm:$0xff]
      %v264 = vld [vmem:[%s224 + $0xf0] sm:$0xff]
      %v265 = vld [vmem:[%s224 + $0xf8] sm:$0xff]
      %v266 = vpack.c.bf16 %v236, %v234
      %v267 = vpack.c.bf16 %v237, %v235
      %v268 = vpack.c.bf16 %v240, %v238
      %v269 = vpack.c.bf16 %v241, %v239
      %v270 = vpack.c.bf16 %v244, %v242
      %v271 = vpack.c.bf16 %v245, %v243
      %v272 = vpack.c.bf16 %v248, %v246
      %v273 = vpack.c.bf16 %v249, %v247
      %v274 = vpack.c.bf16 %v252, %v250
      %v275 = vpack.c.bf16 %v253, %v251
      %v276 = vpack.c.bf16 %v256, %v254
      %v277 = vpack.c.bf16 %v257, %v255
      %v278 = vpack.c.bf16 %v260, %v258
      %v279 = vpack.c.bf16 %v261, %v259
      %v280 = vpack.c.bf16 %v264, %v262
      %v281 = vpack.c.bf16 %v265, %v263
      %v282 = vld [vmem:[%s1] sm:$0xf]
      %v283 = vld [vmem:[%s1 + $0x4] sm:$0xf]
      %v284 = vld [vmem:[%s1 + $0x8] sm:$0xf]
      %v285 = vld [vmem:[%s1 + $0xc] sm:$0xf]
      %v286 = vld [vmem:[%s1 + $0x10] sm:$0xf]
      %v287 = vld [vmem:[%s1 + $0x14] sm:$0xf]
      %v288 = vld [vmem:[%s1 + $0x18] sm:$0xf]
      %v289 = vld [vmem:[%s1 + $0x1c] sm:$0xf]
      %v290 = vld [vmem:[%s1 + $0x20] sm:$0xf]
      %v291 = vld [vmem:[%s1 + $0x24] sm:$0xf]
      %v292 = vld [vmem:[%s1 + $0x28] sm:$0xf]
      %v293 = vld [vmem:[%s1 + $0x2c] sm:$0xf]
      %v294 = vld [vmem:[%s1 + $0x30] sm:$0xf]
      %v295 = vld [vmem:[%s1 + $0x34] sm:$0xf]
      %v296 = vld [vmem:[%s1 + $0x38] sm:$0xf]
      %v297 = vld [vmem:[%s1 + $0x3c] sm:$0xf]
      %v298 = vld [vmem:[%s1 + $0x40] sm:$0xf]
      %v299 = vld [vmem:[%s1 + $0x44] sm:$0xf]
      %v300 = vld [vmem:[%s1 + $0x48] sm:$0xf]
      %v301 = vld [vmem:[%s1 + $0x4c] sm:$0xf]
      %v302 = vld [vmem:[%s1 + $0x50] sm:$0xf]
      %v303 = vld [vmem:[%s1 + $0x54] sm:$0xf]
      %v304 = vld [vmem:[%s1 + $0x58] sm:$0xf]
      %v305 = vld [vmem:[%s1 + $0x5c] sm:$0xf]
      %v306 = vld [vmem:[%s1 + $0x60] sm:$0xf]
      %v307 = vld [vmem:[%s1 + $0x64] sm:$0xf]
      %v308 = vld [vmem:[%s1 + $0x68] sm:$0xf]
      %v309 = vld [vmem:[%s1 + $0x6c] sm:$0xf]
      %v310 = vld [vmem:[%s1 + $0x70] sm:$0xf]
      %v311 = vld [vmem:[%s1 + $0x74] sm:$0xf]
      %v312 = vld [vmem:[%s1 + $0x78] sm:$0xf]
      %v313 = vld [vmem:[%s1 + $0x7c] sm:$0xf]
      %v346 = vunpack.c.l.b16 %v282
      %v347 = vunpack.c.l.b16 %v283
      %v348 = vunpack.c.l.b16 %v284
      %v349 = vunpack.c.l.b16 %v285
      %v350 = vunpack.c.l.b16 %v286
      %v351 = vunpack.c.l.b16 %v287
      %v352 = vunpack.c.l.b16 %v288
      %v353 = vunpack.c.l.b16 %v289
      %v354 = vunpack.c.l.b16 %v290
      %v355 = vunpack.c.l.b16 %v291
      %v356 = vunpack.c.l.b16 %v292
      %v357 = vunpack.c.l.b16 %v293
      %v358 = vunpack.c.l.b16 %v294
      %v359 = vunpack.c.l.b16 %v295
      %v360 = vunpack.c.l.b16 %v296
      %v361 = vunpack.c.l.b16 %v297
      %v362 = vunpack.c.l.b16 %v298
      %v363 = vunpack.c.l.b16 %v299
      %v364 = vunpack.c.l.b16 %v300
      %v365 = vunpack.c.l.b16 %v301
      %v366 = vunpack.c.l.b16 %v302
      %v367 = vunpack.c.l.b16 %v303
      %v368 = vunpack.c.l.b16 %v304
      %v369 = vunpack.c.l.b16 %v305
      %v370 = vunpack.c.l.b16 %v306
      %v371 = vunpack.c.l.b16 %v307
      %v372 = vunpack.c.l.b16 %v308
      %v373 = vunpack.c.l.b16 %v309
      %v374 = vunpack.c.l.b16 %v310
      %v375 = vunpack.c.l.b16 %v311
      %v376 = vunpack.c.l.b16 %v312
      %v377 = vunpack.c.l.b16 %v313
      %v378 = vpack.c.b16 %v347, %v346
      %v379 = vpack.c.b16 %v349, %v348
      %v380 = vpack.c.b16 %v351, %v350
      %v381 = vpack.c.b16 %v353, %v352
      %v382 = vpack.c.b16 %v355, %v354
      %v383 = vpack.c.b16 %v357, %v356
      %v384 = vpack.c.b16 %v359, %v358
      %v385 = vpack.c.b16 %v361, %v360
      %v386 = vpack.c.b16 %v363, %v362
      %v387 = vpack.c.b16 %v365, %v364
      %v388 = vpack.c.b16 %v367, %v366
      %v389 = vpack.c.b16 %v369, %v368
      %v390 = vpack.c.b16 %v371, %v370
      %v391 = vpack.c.b16 %v373, %v372
      %v392 = vpack.c.b16 %v375, %v374
      %v393 = vpack.c.b16 %v377, %v376
      %410 = vmatprep.subr.bf16.mxu0 0
      %411 = vmatpush1.bf16.msra.mxu0 %v378
      %412 = vmatprep.subr.bf16.mxu0 0
      %413 = vmatpush1.bf16.msra.mxu0 %v379
      %414 = vmatprep.subr.bf16.mxu0 0
      %415 = vmatpush1.bf16.msra.mxu0 %v380
      %416 = vmatprep.subr.bf16.mxu0 0
      %417 = vmatpush1.bf16.msra.mxu0 %v381
      %418 = vmatprep.subr.bf16.mxu0 0
      %419 = vmatpush1.bf16.msra.mxu0 %v382
      %420 = vmatprep.subr.bf16.mxu0 0
      %421 = vmatpush1.bf16.msra.mxu0 %v383
      %422 = vmatprep.subr.bf16.mxu0 0
      %423 = vmatpush1.bf16.msra.mxu0 %v384
      %424 = vmatprep.subr.bf16.mxu0 0
      %425 = vmatpush1.bf16.msra.mxu0 %v385
      %426 = vmatprep.subr.bf16.mxu0 0
      %427 = vmatpush1.bf16.msra.mxu0 %v386
      %428 = vmatprep.subr.bf16.mxu0 0
      %429 = vmatpush1.bf16.msra.mxu0 %v387
      %430 = vmatprep.subr.bf16.mxu0 0
      %431 = vmatpush1.bf16.msra.mxu0 %v388
      %432 = vmatprep.subr.bf16.mxu0 0
      %433 = vmatpush1.bf16.msra.mxu0 %v389
      %434 = vmatprep.subr.bf16.mxu0 0
      %435 = vmatpush1.bf16.msra.mxu0 %v390
      %436 = vmatprep.subr.bf16.mxu0 0
      %437 = vmatpush1.bf16.msra.mxu0 %v391
      %438 = vmatprep.subr.bf16.mxu0 0
      %439 = vmatpush1.bf16.msra.mxu0 %v392
      %440 = vmatprep.subr.bf16.mxu0 0
      %441 = vmatpush1.bf16.msra.mxu0 %v393
      %442 = vmatprep.mubr.bf16.mxu0 %v267
      %443 = vmatmul.mubr.bf16.gmra.mrb[0].mxu0 %v266
      %v444 = vpop.f32.mrb[0].mxu0
      %v445 = vadd.f32 0.0, %v444
      %v446 = vpop.f32.mrb[0].mxu0
      %v447 = vpop.f32.mrb[0].mxu0
      %v448 = vadd.f32 0.0, %v447
      %v449 = vpop.f32.mrb[0].mxu0
      %450 = vmatprep.mubr.bf16.mxu0 %v269
      %451 = vmatmul.mubr.bf16.gmra.mrb[0].mxu0 %v268
      %v452 = vpop.f32.mrb[0].mxu0
      %v453 = vadd.f32 0.0, %v452
      %v454 = vpop.f32.mrb[0].mxu0
      %v455 = vpop.f32.mrb[0].mxu0
      %v456 = vadd.f32 0.0, %v455
      %v457 = vpop.f32.mrb[0].mxu0
      %458 = vmatprep.mubr.bf16.mxu0 %v271
      %459 = vmatmul.mubr.bf16.gmra.mrb[0].mxu0 %v270
      %v460 = vpop.f32.mrb[0].mxu0
      %v461 = vadd.f32 0.0, %v460
      %v462 = vpop.f32.mrb[0].mxu0
      %v463 = vpop.f32.mrb[0].mxu0
      %v464 = vadd.f32 0.0, %v463
      %v465 = vpop.f32.mrb[0].mxu0
      %466 = vmatprep.mubr.bf16.mxu0 %v273
      %467 = vmatmul.mubr.bf16.gmra.mrb[0].mxu0 %v272
      %v468 = vpop.f32.mrb[0].mxu0
      %v469 = vadd.f32 0.0, %v468
      %v470 = vpop.f32.mrb[0].mxu0
      %v471 = vpop.f32.mrb[0].mxu0
      %v472 = vadd.f32 0.0, %v471
      %v473 = vpop.f32.mrb[0].mxu0
      %474 = vmatprep.mubr.bf16.mxu0 %v275
      %475 = vmatmul.mubr.bf16.gmra.mrb[0].mxu0 %v274
      %v476 = vpop.f32.mrb[0].mxu0
      %v477 = vadd.f32 0.0, %v476
      %v478 = vpop.f32.mrb[0].mxu0
      %v479 = vpop.f32.mrb[0].mxu0
      %v480 = vadd.f32 0.0, %v479
      %v481 = vpop.f32.mrb[0].mxu0
      %482 = vmatprep.mubr.bf16.mxu0 %v277
      %483 = vmatmul.mubr.bf16.gmra.mrb[0].mxu0 %v276
      %v484 = vpop.f32.mrb[0].mxu0
      %v485 = vadd.f32 0.0, %v484
      %v486 = vpop.f32.mrb[0].mxu0
      %v487 = vpop.f32.mrb[0].mxu0
      %v488 = vadd.f32 0.0, %v487
      %v489 = vpop.f32.mrb[0].mxu0
      %490 = vmatprep.mubr.bf16.mxu0 %v279
      %491 = vmatmul.mubr.bf16.gmra.mrb[0].mxu0 %v278
      %v492 = vpop.f32.mrb[0].mxu0
      %v493 = vadd.f32 0.0, %v492
      %v494 = vpop.f32.mrb[0].mxu0
      %v495 = vpop.f32.mrb[0].mxu0
      %v496 = vadd.f32 0.0, %v495
      %v497 = vpop.f32.mrb[0].mxu0
      %498 = vmatprep.mubr.bf16.mxu0 %v281
      %499 = vmatmul.mubr.bf16.gmra.mrb[0].mxu0 %v280
      %v500 = vpop.f32.mrb[0].mxu0
      %v501 = vadd.f32 0.0, %v500
      %v502 = vpop.f32.mrb[0].mxu0
      %v503 = vpop.f32.mrb[0].mxu0
      %v504 = vadd.f32 0.0, %v503
      %v505 = vpop.f32.mrb[0].mxu0
      %506 = vdwg.mxu0
      %v507 = vld [vmem:[%s4] ss:$0 sm:$0xff]
      %v508 = vmul.f32 %v445, %v507
      %v509 = vmul.f32 %v448, %v507
      %v510 = vmul.f32 %v453, %v507
      %v511 = vmul.f32 %v456, %v507
      %v512 = vmul.f32 %v461, %v507
      %v513 = vmul.f32 %v464, %v507
      %v514 = vmul.f32 %v469, %v507
      %v515 = vmul.f32 %v472, %v507
      %v516 = vmul.f32 %v477, %v507
      %v517 = vmul.f32 %v480, %v507
      %v518 = vmul.f32 %v485, %v507
      %v519 = vmul.f32 %v488, %v507
      %v520 = vmul.f32 %v493, %v507
      %v521 = vmul.f32 %v496, %v507
      %v522 = vmul.f32 %v501, %v507
      %v523 = vmul.f32 %v504, %v507
      %v524 = vld [vmem:[%s4 + $0x1] ss:$0 sm:$0xff]
      %v525 = vadd.f32 %v508, %v524
      %v526 = vadd.f32 %v509, %v524
      %v527 = vadd.f32 %v510, %v524
      %v528 = vadd.f32 %v511, %v524
      %v529 = vadd.f32 %v512, %v524
      %v530 = vadd.f32 %v513, %v524
      %v531 = vadd.f32 %v514, %v524
      %v532 = vadd.f32 %v515, %v524
      %v533 = vadd.f32 %v516, %v524
      %v534 = vadd.f32 %v517, %v524
      %v535 = vadd.f32 %v518, %v524
      %v536 = vadd.f32 %v519, %v524
      %v537 = vadd.f32 %v520, %v524
      %v538 = vadd.f32 %v521, %v524
      %v539 = vadd.f32 %v522, %v524
      %v540 = vadd.f32 %v523, %v524
      %v541 = vmax.f32 %v525, 0.0
      %v542 = vmax.f32 %v526, 0.0
      %v543 = vmax.f32 %v527, 0.0
      %v544 = vmax.f32 %v528, 0.0
      %v545 = vmax.f32 %v529, 0.0
      %v546 = vmax.f32 %v530, 0.0
      %v547 = vmax.f32 %v531, 0.0
      %v548 = vmax.f32 %v532, 0.0
      %v549 = vmax.f32 %v533, 0.0
      %v550 = vmax.f32 %v534, 0.0
      %v551 = vmax.f32 %v535, 0.0
      %v552 = vmax.f32 %v536, 0.0
      %v553 = vmax.f32 %v537, 0.0
      %v554 = vmax.f32 %v538, 0.0
      %v555 = vmax.f32 %v539, 0.0
      %v556 = vmax.f32 %v540, 0.0
      %v557 = vlaneseq
      %v558 = vshrl.u32 %v557, 7
      %v559 = vadd.s32 %v558, 8
      %v560 = vadd.s32 %v558, 16
      %v561 = vadd.s32 %v558, 24
      %v562 = vadd.s32 %v558, 32
      %v563 = vadd.s32 %v558, 40
      %v564 = vadd.s32 %v558, 48
      %v565 = vadd.s32 %v558, 56
      %v566 = vadd.s32 %v558, 64
      %v567 = vadd.s32 %v558, 72
      %v568 = vadd.s32 %v558, 80
      %v569 = vadd.s32 %v558, 88
      %v570 = vadd.s32 %v558, 96
      %v571 = vadd.s32 %v558, 104
      %v572 = vadd.s32 %v558, 112
      %v573 = vadd.s32 %v558, 120
      %vm574 = vcmp.lt.s32.totalorder %v558, 0
      %v575 = vsub.s32 0, %v558
      %v576 = vsel %vm574, %v575, %v558
      %v577 = vshrl.u32 %v576, 4
      %v578 = vand.u32 %v576, 15
      %v579 = vsub.s32 0, %v578
      %v580 = vsel %vm574, %v579, %v578
      %vm581 = vcmp.lt.s32.totalorder %v559, 0
      %v582 = vsub.s32 0, %v559
      %v583 = vsel %vm581, %v582, %v559
      %v584 = vshrl.u32 %v583, 4
      %v585 = vand.u32 %v583, 15
      %v586 = vsub.s32 0, %v585
      %v587 = vsel %vm581, %v586, %v585
      %vm588 = vcmp.lt.s32.totalorder %v560, 0
      %v589 = vsub.s32 0, %v560
      %v590 = vsel %vm588, %v589, %v560
      %v591 = vshrl.u32 %v590, 4
      %v592 = vand.u32 %v590, 15
      %v593 = vsub.s32 0, %v592
      %v594 = vsel %vm588, %v593, %v592
      %vm595 = vcmp.lt.s32.totalorder %v561, 0
      %v596 = vsub.s32 0, %v561
      %v597 = vsel %vm595, %v596, %v561
      %v598 = vshrl.u32 %v597, 4
      %v599 = vand.u32 %v597, 15
      %v600 = vsub.s32 0, %v599
      %v601 = vsel %vm595, %v600, %v599
      %vm602 = vcmp.lt.s32.totalorder %v562, 0
      %v603 = vsub.s32 0, %v562
      %v604 = vsel %vm602, %v603, %v562
      %v605 = vshrl.u32 %v604, 4
      %v606 = vand.u32 %v604, 15
      %v607 = vsub.s32 0, %v606
      %v608 = vsel %vm602, %v607, %v606
      %vm609 = vcmp.lt.s32.totalorder %v563, 0
      %v610 = vsub.s32 0, %v563
      %v611 = vsel %vm609, %v610, %v563
      %v612 = vshrl.u32 %v611, 4
      %v613 = vand.u32 %v611, 15
      %v614 = vsub.s32 0, %v613
      %v615 = vsel %vm609, %v614, %v613
      %vm616 = vcmp.lt.s32.totalorder %v564, 0
      %v617 = vsub.s32 0, %v564
      %v618 = vsel %vm616, %v617, %v564
      %v619 = vshrl.u32 %v618, 4
      %v620 = vand.u32 %v618, 15
      %v621 = vsub.s32 0, %v620
      %v622 = vsel %vm616, %v621, %v620
      %vm623 = vcmp.lt.s32.totalorder %v565, 0
      %v624 = vsub.s32 0, %v565
      %v625 = vsel %vm623, %v624, %v565
      %v626 = vshrl.u32 %v625, 4
      %v627 = vand.u32 %v625, 15
      %v628 = vsub.s32 0, %v627
      %v629 = vsel %vm623, %v628, %v627
      %vm630 = vcmp.lt.s32.totalorder %v566, 0
      %v631 = vsub.s32 0, %v566
      %v632 = vsel %vm630, %v631, %v566
      %v633 = vshrl.u32 %v632, 4
      %v634 = vand.u32 %v632, 15
      %v635 = vsub.s32 0, %v634
      %v636 = vsel %vm630, %v635, %v634
      %vm637 = vcmp.lt.s32.totalorder %v567, 0
      %v638 = vsub.s32 0, %v567
      %v639 = vsel %vm637, %v638, %v567
      %v640 = vshrl.u32 %v639, 4
      %v641 = vand.u32 %v639, 15
      %v642 = vsub.s32 0, %v641
      %v643 = vsel %vm637, %v642, %v641
      %vm644 = vcmp.lt.s32.totalorder %v568, 0
      %v645 = vsub.s32 0, %v568
      %v646 = vsel %vm644, %v645, %v568
      %v647 = vshrl.u32 %v646, 4
      %v648 = vand.u32 %v646, 15
      %v649 = vsub.s32 0, %v648
      %v650 = vsel %vm644, %v649, %v648
      %vm651 = vcmp.lt.s32.totalorder %v569, 0
      %v652 = vsub.s32 0, %v569
      %v653 = vsel %vm651, %v652, %v569
      %v654 = vshrl.u32 %v653, 4
      %v655 = vand.u32 %v653, 15
      %v656 = vsub.s32 0, %v655
      %v657 = vsel %vm651, %v656, %v655
      %vm658 = vcmp.lt.s32.totalorder %v570, 0
      %v659 = vsub.s32 0, %v570
      %v660 = vsel %vm658, %v659, %v570
      %v661 = vshrl.u32 %v660, 4
      %v662 = vand.u32 %v660, 15
      %v663 = vsub.s32 0, %v662
      %v664 = vsel %vm658, %v663, %v662
      %vm665 = vcmp.lt.s32.totalorder %v571, 0
      %v666 = vsub.s32 0, %v571
      %v667 = vsel %vm665, %v666, %v571
      %v668 = vshrl.u32 %v667, 4
      %v669 = vand.u32 %v667, 15
      %v670 = vsub.s32 0, %v669
      %v671 = vsel %vm665, %v670, %v669
      %vm672 = vcmp.lt.s32.totalorder %v572, 0
      %v673 = vsub.s32 0, %v572
      %v674 = vsel %vm672, %v673, %v572
      %v675 = vshrl.u32 %v674, 4
      %v676 = vand.u32 %v674, 15
      %v677 = vsub.s32 0, %v676
      %v678 = vsel %vm672, %v677, %v676
      %vm679 = vcmp.lt.s32.totalorder %v573, 0
      %v680 = vsub.s32 0, %v573
      %v681 = vsel %vm679, %v680, %v573
      %v682 = vshrl.u32 %v681, 4
      %v683 = vand.u32 %v681, 15
      %v684 = vsub.s32 0, %v683
      %v685 = vsel %vm679, %v684, %v683
      %vm686 = vcmp.ne.s32.totalorder %v580, 0
      %vm687 = vcmp.ne.s32.totalorder %v587, 0
      %vm688 = vcmp.ne.s32.totalorder %v594, 0
      %vm689 = vcmp.ne.s32.totalorder %v601, 0
      %vm690 = vcmp.ne.s32.totalorder %v608, 0
      %vm691 = vcmp.ne.s32.totalorder %v615, 0
      %vm692 = vcmp.ne.s32.totalorder %v622, 0
      %vm693 = vcmp.ne.s32.totalorder %v629, 0
      %vm694 = vcmp.ne.s32.totalorder %v636, 0
      %vm695 = vcmp.ne.s32.totalorder %v643, 0
      %vm696 = vcmp.ne.s32.totalorder %v650, 0
      %vm697 = vcmp.ne.s32.totalorder %v657, 0
      %vm698 = vcmp.ne.s32.totalorder %v664, 0
      %vm699 = vcmp.ne.s32.totalorder %v671, 0
      %vm700 = vcmp.ne.s32.totalorder %v678, 0
      %vm701 = vcmp.ne.s32.totalorder %v685, 0
      %vm702 = vcmp.lt.s32.totalorder %v580, 0
      %vm703 = vcmp.lt.s32.totalorder %v587, 0
      %vm704 = vcmp.lt.s32.totalorder %v594, 0
      %vm705 = vcmp.lt.s32.totalorder %v601, 0
      %vm706 = vcmp.lt.s32.totalorder %v608, 0
      %vm707 = vcmp.lt.s32.totalorder %v615, 0
      %vm708 = vcmp.lt.s32.totalorder %v622, 0
      %vm709 = vcmp.lt.s32.totalorder %v629, 0
      %vm710 = vcmp.lt.s32.totalorder %v636, 0
      %vm711 = vcmp.lt.s32.totalorder %v643, 0
      %vm712 = vcmp.lt.s32.totalorder %v650, 0
      %vm713 = vcmp.lt.s32.totalorder %v657, 0
      %vm714 = vcmp.lt.s32.totalorder %v664, 0
      %vm715 = vcmp.lt.s32.totalorder %v671, 0
      %vm716 = vcmp.lt.s32.totalorder %v678, 0
      %vm717 = vcmp.lt.s32.totalorder %v685, 0
      %vm718 = vmand %vm702, %vm686
      %vm719 = vmand %vm703, %vm687
      %vm720 = vmand %vm704, %vm688
      %vm721 = vmand %vm705, %vm689
      %vm722 = vmand %vm706, %vm690
      %vm723 = vmand %vm707, %vm691
      %vm724 = vmand %vm708, %vm692
      %vm725 = vmand %vm709, %vm693
      %vm726 = vmand %vm710, %vm694
      %vm727 = vmand %vm711, %vm695
      %vm728 = vmand %vm712, %vm696
      %vm729 = vmand %vm713, %vm697
      %vm730 = vmand %vm714, %vm698
      %vm731 = vmand %vm715, %vm699
      %vm732 = vmand %vm716, %vm700
      %vm733 = vmand %vm717, %vm701
      %v734 = vadd.s32 %v580, 16
      %v735 = vadd.s32 %v587, 16
      %v736 = vadd.s32 %v594, 16
      %v737 = vadd.s32 %v601, 16
      %v738 = vadd.s32 %v608, 16
      %v739 = vadd.s32 %v615, 16
      %v740 = vadd.s32 %v622, 16
      %v741 = vadd.s32 %v629, 16
      %v742 = vadd.s32 %v636, 16
      %v743 = vadd.s32 %v643, 16
      %v744 = vadd.s32 %v650, 16
      %v745 = vadd.s32 %v657, 16
      %v746 = vadd.s32 %v664, 16
      %v747 = vadd.s32 %v671, 16
      %v748 = vadd.s32 %v678, 16
      %v749 = vadd.s32 %v685, 16
      %v750 = vsel %vm718, %v734, %v580
      %v751 = vsel %vm719, %v735, %v587
      %v752 = vsel %vm720, %v736, %v594
      %v753 = vsel %vm721, %v737, %v601
      %v754 = vsel %vm722, %v738, %v608
      %v755 = vsel %vm723, %v739, %v615
      %v756 = vsel %vm724, %v740, %v622
      %v757 = vsel %vm725, %v741, %v629
      %v758 = vsel %vm726, %v742, %v636
      %v759 = vsel %vm727, %v743, %v643
      %v760 = vsel %vm728, %v744, %v650
      %v761 = vsel %vm729, %v745, %v657
      %v762 = vsel %vm730, %v746, %v664
      %v763 = vsel %vm731, %v747, %v671
      %v764 = vsel %vm732, %v748, %v678
      %v765 = vsel %vm733, %v749, %v685
      %v766 = vpack.c.bf16 %v542, %v541
      %v767 = vpack.c.bf16 %v544, %v543
      %v768 = vpack.c.bf16 %v546, %v545
      %v769 = vpack.c.bf16 %v548, %v547
      %v770 = vpack.c.bf16 %v550, %v549
      %v771 = vpack.c.bf16 %v552, %v551
      %v772 = vpack.c.bf16 %v554, %v553
      %v773 = vpack.c.bf16 %v556, %v555
      %vm774 = vcmp.eq.s32.totalorder %v750, 0
      %vm775 = vcmp.eq.s32.totalorder %v751, 0
      %vm776 = vcmp.eq.s32.totalorder %v752, 0
      %vm777 = vcmp.eq.s32.totalorder %v753, 0
      %vm778 = vcmp.eq.s32.totalorder %v754, 0
      %vm779 = vcmp.eq.s32.totalorder %v755, 0
      %vm780 = vcmp.eq.s32.totalorder %v756, 0
      %vm781 = vcmp.eq.s32.totalorder %v757, 0
      %vm782 = vcmp.eq.s32.totalorder %v758, 0
      %vm783 = vcmp.eq.s32.totalorder %v759, 0
      %vm784 = vcmp.eq.s32.totalorder %v760, 0
      %vm785 = vcmp.eq.s32.totalorder %v761, 0
      %vm786 = vcmp.eq.s32.totalorder %v762, 0
      %vm787 = vcmp.eq.s32.totalorder %v763, 0
      %vm788 = vcmp.eq.s32.totalorder %v764, 0
      %vm789 = vcmp.eq.s32.totalorder %v765, 0
      %v790 = vrot.slane %v541, 7
      %v791 = vrot.slane %v542, 7
      %v792 = vrot.slane %v543, 7
      %v793 = vrot.slane %v544, 7
      %v794 = vrot.slane %v545, 7
      %v795 = vrot.slane %v546, 7
      %v796 = vrot.slane %v547, 7
      %v797 = vrot.slane %v548, 7
      %v798 = vrot.slane %v549, 7
      %v799 = vrot.slane %v550, 7
      %v800 = vrot.slane %v551, 7
      %v801 = vrot.slane %v552, 7
      %v802 = vrot.slane %v553, 7
      %v803 = vrot.slane %v554, 7
      %v804 = vrot.slane %v555, 7
      %v805 = vrot.slane %v556, 7
      %vm806 = vcmp.lt.s32.totalorder %v558, 1
      %v807 = vsel %vm806, %v804, %v805
      %v808 = vsel %vm806, %v803, %v804
      %v809 = vsel %vm806, %v802, %v803
      %v810 = vsel %vm806, %v801, %v802
      %v811 = vsel %vm806, %v800, %v801
      %v812 = vsel %vm806, %v799, %v800
      %v813 = vsel %vm806, %v798, %v799
      %v814 = vsel %vm806, %v797, %v798
      %v815 = vsel %vm806, %v796, %v797
      %v816 = vsel %vm806, %v795, %v796
      %v817 = vsel %vm806, %v794, %v795
      %v818 = vsel %vm806, %v793, %v794
      %v819 = vsel %vm806, %v792, %v793
      %v820 = vsel %vm806, %v791, %v792
      %v821 = vsel %vm806, %v790, %v791
      %v822 = vsel %vm806, %v805, %v790
      %v823 = vsel %vm774, 0.0, %v822
      %v824 = vsel %vm775, 0.0, %v821
      %v825 = vsel %vm776, 0.0, %v820
      %v826 = vsel %vm777, 0.0, %v819
      %v827 = vsel %vm778, 0.0, %v818
      %v828 = vsel %vm779, 0.0, %v817
      %v829 = vsel %vm780, 0.0, %v816
      %v830 = vsel %vm781, 0.0, %v815
      %v831 = vsel %vm782, 0.0, %v814
      %v832 = vsel %vm783, 0.0, %v813
      %v833 = vsel %vm784, 0.0, %v812
      %v834 = vsel %vm785, 0.0, %v811
      %v835 = vsel %vm786, 0.0, %v810
      %v836 = vsel %vm787, 0.0, %v809
      %v837 = vsel %vm788, 0.0, %v808
      %v838 = vsel %vm789, 0.0, %v807
      %v839 = vpack.c.bf16 %v824, %v823
      %v840 = vpack.c.bf16 %v826, %v825
      %v841 = vpack.c.bf16 %v828, %v827
      %v842 = vpack.c.bf16 %v830, %v829
      %v843 = vpack.c.bf16 %v832, %v831
      %v844 = vpack.c.bf16 %v834, %v833
      %v845 = vpack.c.bf16 %v836, %v835
      %v846 = vpack.c.bf16 %v838, %v837
      %vm847 = vcmp.eq.s32.totalorder %v750, 15
      %vm848 = vcmp.eq.s32.totalorder %v751, 15
      %vm849 = vcmp.eq.s32.totalorder %v752, 15
      %vm850 = vcmp.eq.s32.totalorder %v753, 15
      %vm851 = vcmp.eq.s32.totalorder %v754, 15
      %vm852 = vcmp.eq.s32.totalorder %v755, 15
      %vm853 = vcmp.eq.s32.totalorder %v756, 15
      %vm854 = vcmp.eq.s32.totalorder %v757, 15
      %vm855 = vcmp.eq.s32.totalorder %v758, 15
      %vm856 = vcmp.eq.s32.totalorder %v759, 15
      %vm857 = vcmp.eq.s32.totalorder %v760, 15
      %vm858 = vcmp.eq.s32.totalorder %v761, 15
      %vm859 = vcmp.eq.s32.totalorder %v762, 15
      %vm860 = vcmp.eq.s32.totalorder %v763, 15
      %vm861 = vcmp.eq.s32.totalorder %v764, 15
      %vm862 = vcmp.eq.s32.totalorder %v765, 15
      %v863 = vrot.slane %v541, 1
      %v864 = vrot.slane %v542, 1
      %v865 = vrot.slane %v543, 1
      %v866 = vrot.slane %v544, 1
      %v867 = vrot.slane %v545, 1
      %v868 = vrot.slane %v546, 1
      %v869 = vrot.slane %v547, 1
      %v870 = vrot.slane %v548, 1
      %v871 = vrot.slane %v549, 1
      %v872 = vrot.slane %v550, 1
      %v873 = vrot.slane %v551, 1
      %v874 = vrot.slane %v552, 1
      %v875 = vrot.slane %v553, 1
      %v876 = vrot.slane %v554, 1
      %v877 = vrot.slane %v555, 1
      %v878 = vrot.slane %v556, 1
      %vm879 = vcmp.lt.s32.totalorder %v558, 7
      %v880 = vsel %vm879, %v877, %v878
      %v881 = vsel %vm879, %v876, %v877
      %v882 = vsel %vm879, %v875, %v876
      %v883 = vsel %vm879, %v874, %v875
      %v884 = vsel %vm879, %v873, %v874
      %v885 = vsel %vm879, %v872, %v873
      %v886 = vsel %vm879, %v871, %v872
      %v887 = vsel %vm879, %v870, %v871
      %v888 = vsel %vm879, %v869, %v870
      %v889 = vsel %vm879, %v868, %v869
      %v890 = vsel %vm879, %v867, %v868
      %v891 = vsel %vm879, %v866, %v867
      %v892 = vsel %vm879, %v865, %v866
      %v893 = vsel %vm879, %v864, %v865
      %v894 = vsel %vm879, %v863, %v864
      %v895 = vsel %vm879, %v878, %v863
      %v896 = vsel %vm847, 0.0, %v894
      %v897 = vsel %vm848, 0.0, %v893
      %v898 = vsel %vm849, 0.0, %v892
      %v899 = vsel %vm850, 0.0, %v891
      %v900 = vsel %vm851, 0.0, %v890
      %v901 = vsel %vm852, 0.0, %v889
      %v902 = vsel %vm853, 0.0, %v888
      %v903 = vsel %vm854, 0.0, %v887
      %v904 = vsel %vm855, 0.0, %v886
      %v905 = vsel %vm856, 0.0, %v885
      %v906 = vsel %vm857, 0.0, %v884
      %v907 = vsel %vm858, 0.0, %v883
      %v908 = vsel %vm859, 0.0, %v882
      %v909 = vsel %vm860, 0.0, %v881
      %v910 = vsel %vm861, 0.0, %v880
      %v911 = vsel %vm862, 0.0, %v895
      %v912 = vpack.c.bf16 %v897, %v896
      %v913 = vpack.c.bf16 %v899, %v898
      %v914 = vpack.c.bf16 %v901, %v900
      %v915 = vpack.c.bf16 %v903, %v902
      %v916 = vpack.c.bf16 %v905, %v904
      %v917 = vpack.c.bf16 %v907, %v906
      %v918 = vpack.c.bf16 %v909, %v908
      %v919 = vpack.c.bf16 %v911, %v910
      %v920 = vld [vmem:[%s2] sm:$0xf]
      %v921 = vld [vmem:[%s2 + $0x4] sm:$0xf]
      %v922 = vld [vmem:[%s2 + $0x8] sm:$0xf]
      %v923 = vld [vmem:[%s2 + $0xc] sm:$0xf]
      %v924 = vld [vmem:[%s2 + $0x10] sm:$0xf]
      %v925 = vld [vmem:[%s2 + $0x14] sm:$0xf]
      %v926 = vld [vmem:[%s2 + $0x18] sm:$0xf]
      %v927 = vld [vmem:[%s2 + $0x1c] sm:$0xf]
      %s928 = scalar_lea.vmem %s2, 32
      %v929 = vld [vmem:[%s928] sm:$0xf]
      %v930 = vld [vmem:[%s928 + $0x4] sm:$0xf]
      %v931 = vld [vmem:[%s928 + $0x8] sm:$0xf]
      %v932 = vld [vmem:[%s928 + $0xc] sm:$0xf]
      %v933 = vld [vmem:[%s928 + $0x10] sm:$0xf]
      %v934 = vld [vmem:[%s928 + $0x14] sm:$0xf]
      %v935 = vld [vmem:[%s928 + $0x18] sm:$0xf]
      %v936 = vld [vmem:[%s928 + $0x1c] sm:$0xf]
      %v945 = vunpack.c.l.b16 %v929
      %v946 = vunpack.c.l.b16 %v930
      %v947 = vunpack.c.l.b16 %v931
      %v948 = vunpack.c.l.b16 %v932
      %v949 = vunpack.c.l.b16 %v933
      %v950 = vunpack.c.l.b16 %v934
      %v951 = vunpack.c.l.b16 %v935
      %v952 = vunpack.c.l.b16 %v936
      %v953 = vpack.c.b16 %v946, %v945
      %v954 = vpack.c.b16 %v948, %v947
      %v955 = vpack.c.b16 %v950, %v949
      %v956 = vpack.c.b16 %v952, %v951
      %vm961 = vcmask 523264
      %v963 = vsel %vm961, %v766, 0
      %v966 = vsel %vm961, %v767, 0
      %v969 = vsel %vm961, %v768, 0
      %v972 = vsel %vm961, %v769, 0
      %v975 = vsel %vm961, %v770, 0
      %v978 = vsel %vm961, %v771, 0
      %v981 = vsel %vm961, %v772, 0
      %v984 = vsel %vm961, %v773, 0
      %986 = vmatprep.subr.bf16.mxu0 0
      %987 = vmatpush1.bf16.msra.mxu0 %v953
      %988 = vmatprep.subr.bf16.mxu0 0
      %989 = vmatpush1.bf16.msra.mxu0 %v954
      %990 = vmatprep.subr.bf16.mxu0 0
      %991 = vmatpush1.bf16.msra.mxu0 %v955
      %992 = vmatprep.subr.bf16.mxu0 0
      %993 = vmatpush1.bf16.msra.mxu0 %v956
      %994 = vmatprep.subr.bf16.mxu0 0
      %995 = vmatpush1.bf16.msra.mxu0 0
      %996 = vmatprep.subr.bf16.mxu0 0
      %997 = vmatpush1.bf16.msra.mxu0 0
      %998 = vmatprep.subr.bf16.mxu0 0
      %999 = vmatpush1.bf16.msra.mxu0 0
      %1000 = vmatprep.subr.bf16.mxu0 0
      %1001 = vmatpush1.bf16.msra.mxu0 0
      %1002 = vmatprep.subr.bf16.mxu0 0
      %1003 = vmatpush1.bf16.msra.mxu0 0
      %1004 = vmatprep.subr.bf16.mxu0 0
      %1005 = vmatpush1.bf16.msra.mxu0 0
      %1006 = vmatprep.subr.bf16.mxu0 0
      %1007 = vmatpush1.bf16.msra.mxu0 0
      %1008 = vmatprep.subr.bf16.mxu0 0
      %1009 = vmatpush1.bf16.msra.mxu0 0
      %1010 = vmatprep.subr.bf16.mxu0 0
      %1011 = vmatpush1.bf16.msra.mxu0 0
      %1012 = vmatprep.subr.bf16.mxu0 0
      %1013 = vmatpush1.bf16.msra.mxu0 0
      %1014 = vmatprep.subr.bf16.mxu0 0
      %1015 = vmatpush1.bf16.msra.mxu0 0
      %1016 = vmatprep.subr.bf16.mxu0 0
      %1017 = vmatpush1.bf16.msra.mxu0 0
      %1018 = vmatprep.mubr.bf16.mxu0 0
      %1019 = vmatmul.mubr.bf16.gmra.mrb[0].mxu0 %v963
      %v1020 = vpop.f32.mrb[0].mxu0
      %v1021 = vadd.f32 0.0, %v1020
      %v1022 = vpop.f32.mrb[0].mxu0
      %v1023 = vpop.f32.mrb[0].mxu0
      %v1024 = vadd.f32 0.0, %v1023
      %v1025 = vpop.f32.mrb[0].mxu0
      %1026 = vmatprep.mubr.bf16.mxu0 0
      %1027 = vmatmul.mubr.bf16.gmra.mrb[0].mxu0 %v966
      %v1028 = vpop.f32.mrb[0].mxu0
      %v1029 = vadd.f32 0.0, %v1028
      %v1030 = vpop.f32.mrb[0].mxu0
      %v1031 = vpop.f32.mrb[0].mxu0
      %v1032 = vadd.f32 0.0, %v1031
      %v1033 = vpop.f32.mrb[0].mxu0
      %1034 = vmatprep.mubr.bf16.mxu0 0
      %1035 = vmatmul.mubr.bf16.gmra.mrb[0].mxu0 %v969
      %v1036 = vpop.f32.mrb[0].mxu0
      %v1037 = vadd.f32 0.0, %v1036
      %v1038 = vpop.f32.mrb[0].mxu0
      %v1039 = vpop.f32.mrb[0].mxu0
      %v1040 = vadd.f32 0.0, %v1039
      %v1041 = vpop.f32.mrb[0].mxu0
      %1042 = vmatprep.mubr.bf16.mxu0 0
      %1043 = vmatmul.mubr.bf16.gmra.mrb[0].mxu0 %v972
      %v1044 = vpop.f32.mrb[0].mxu0
      %v1045 = vadd.f32 0.0, %v1044
      %v1046 = vpop.f32.mrb[0].mxu0
      %v1047 = vpop.f32.mrb[0].mxu0
      %v1048 = vadd.f32 0.0, %v1047
      %v1049 = vpop.f32.mrb[0].mxu0
      %1050 = vmatprep.mubr.bf16.mxu0 0
      %1051 = vmatmul.mubr.bf16.gmra.mrb[0].mxu0 %v975
      %v1052 = vpop.f32.mrb[0].mxu0
      %v1053 = vadd.f32 0.0, %v1052
      %v1054 = vpop.f32.mrb[0].mxu0
      %v1055 = vpop.f32.mrb[0].mxu0
      %v1056 = vadd.f32 0.0, %v1055
      %v1057 = vpop.f32.mrb[0].mxu0
      %1058 = vmatprep.mubr.bf16.mxu0 0
      %1059 = vmatmul.mubr.bf16.gmra.mrb[0].mxu0 %v978
      %v1060 = vpop.f32.mrb[0].mxu0
      %v1061 = vadd.f32 0.0, %v1060
      %v1062 = vpop.f32.mrb[0].mxu0
      %v1063 = vpop.f32.mrb[0].mxu0
      %v1064 = vadd.f32 0.0, %v1063
      %v1065 = vpop.f32.mrb[0].mxu0
      %1066 = vmatprep.mubr.bf16.mxu0 0
      %1067 = vmatmul.mubr.bf16.gmra.mrb[0].mxu0 %v981
      %v1068 = vpop.f32.mrb[0].mxu0
      %v1069 = vadd.f32 0.0, %v1068
      %v1070 = vpop.f32.mrb[0].mxu0
      %v1071 = vpop.f32.mrb[0].mxu0
      %v1072 = vadd.f32 0.0, %v1071
      %v1073 = vpop.f32.mrb[0].mxu0
      %1074 = vmatprep.mubr.bf16.mxu0 0
      %1075 = vmatmul.mubr.bf16.gmra.mrb[0].mxu0 %v984
      %v1076 = vpop.f32.mrb[0].mxu0
      %v1077 = vadd.f32 0.0, %v1076
      %v1078 = vpop.f32.mrb[0].mxu0
      %v1079 = vpop.f32.mrb[0].mxu0
      %v1080 = vadd.f32 0.0, %v1079
      %v1081 = vpop.f32.mrb[0].mxu0
      %1082 = vdwg.mxu0
      %v1091 = vunpack.c.l.b16 %v920
      %v1092 = vunpack.c.l.b16 %v921
      %v1093 = vunpack.c.l.b16 %v922
      %v1094 = vunpack.c.l.b16 %v923
      %v1095 = vunpack.c.l.b16 %v924
      %v1096 = vunpack.c.l.b16 %v925
      %v1097 = vunpack.c.l.b16 %v926
      %v1098 = vunpack.c.l.b16 %v927
      %v1099 = vpack.c.b16 %v1092, %v1091
      %v1100 = vpack.c.b16 %v1094, %v1093
      %v1101 = vpack.c.b16 %v1096, %v1095
      %v1102 = vpack.c.b16 %v1098, %v1097
      %v1108 = vsel %vm961, %v839, 0
      %v1111 = vsel %vm961, %v840, 0
      %v1114 = vsel %vm961, %v841, 0
      %v1117 = vsel %vm961, %v842, 0
      %v1120 = vsel %vm961, %v843, 0
      %v1123 = vsel %vm961, %v844, 0
      %v1126 = vsel %vm961, %v845, 0
      %v1129 = vsel %vm961, %v846, 0
      %1131 = vmatprep.subr.bf16.mxu0 0
      %1132 = vmatpush1.bf16.msra.mxu0 %v1099
      %1133 = vmatprep.subr.bf16.mxu0 0
      %1134 = vmatpush1.bf16.msra.mxu0 %v1100
      %1135 = vmatprep.subr.bf16.mxu0 0
      %1136 = vmatpush1.bf16.msra.mxu0 %v1101
      %1137 = vmatprep.subr.bf16.mxu0 0
      %1138 = vmatpush1.bf16.msra.mxu0 %v1102
      %1139 = vmatprep.subr.bf16.mxu0 0
      %1140 = vmatpush1.bf16.msra.mxu0 0
      %1141 = vmatprep.subr.bf16.mxu0 0
      %1142 = vmatpush1.bf16.msra.mxu0 0
      %1143 = vmatprep.subr.bf16.mxu0 0
      %1144 = vmatpush1.bf16.msra.mxu0 0
      %1145 = vmatprep.subr.bf16.mxu0 0
      %1146 = vmatpush1.bf16.msra.mxu0 0
      %1147 = vmatprep.subr.bf16.mxu0 0
      %1148 = vmatpush1.bf16.msra.mxu0 0
      %1149 = vmatprep.subr.bf16.mxu0 0
      %1150 = vmatpush1.bf16.msra.mxu0 0
      %1151 = vmatprep.subr.bf16.mxu0 0
      %1152 = vmatpush1.bf16.msra.mxu0 0
      %1153 = vmatprep.subr.bf16.mxu0 0
      %1154 = vmatpush1.bf16.msra.mxu0 0
      %1155 = vmatprep.subr.bf16.mxu0 0
      %1156 = vmatpush1.bf16.msra.mxu0 0
      %1157 = vmatprep.subr.bf16.mxu0 0
      %1158 = vmatpush1.bf16.msra.mxu0 0
      %1159 = vmatprep.subr.bf16.mxu0 0
      %1160 = vmatpush1.bf16.msra.mxu0 0
      %1161 = vmatprep.subr.bf16.mxu0 0
      %1162 = vmatpush1.bf16.msra.mxu0 0
      %1163 = vmatprep.mubr.bf16.mxu0 0
      %1164 = vmatmul.mubr.bf16.gmra.mrb[0].mxu0 %v1108
      %v1165 = vpop.f32.mrb[0].mxu0
      %v1166 = vadd.f32 %v1021, %v1165
      %v1167 = vpop.f32.mrb[0].mxu0
      %v1168 = vpop.f32.mrb[0].mxu0
      %v1169 = vadd.f32 %v1024, %v1168
      %v1170 = vpop.f32.mrb[0].mxu0
      %1171 = vmatprep.mubr.bf16.mxu0 0
      %1172 = vmatmul.mubr.bf16.gmra.mrb[0].mxu0 %v1111
      %v1173 = vpop.f32.mrb[0].mxu0
      %v1174 = vadd.f32 %v1029, %v1173
      %v1175 = vpop.f32.mrb[0].mxu0
      %v1176 = vpop.f32.mrb[0].mxu0
      %v1177 = vadd.f32 %v1032, %v1176
      %v1178 = vpop.f32.mrb[0].mxu0
      %1179 = vmatprep.mubr.bf16.mxu0 0
      %1180 = vmatmul.mubr.bf16.gmra.mrb[0].mxu0 %v1114
      %v1181 = vpop.f32.mrb[0].mxu0
      %v1182 = vadd.f32 %v1037, %v1181
      %v1183 = vpop.f32.mrb[0].mxu0
      %v1184 = vpop.f32.mrb[0].mxu0
      %v1185 = vadd.f32 %v1040, %v1184
      %v1186 = vpop.f32.mrb[0].mxu0
      %1187 = vmatprep.mubr.bf16.mxu0 0
      %1188 = vmatmul.mubr.bf16.gmra.mrb[0].mxu0 %v1117
      %v1189 = vpop.f32.mrb[0].mxu0
      %v1190 = vadd.f32 %v1045, %v1189
      %v1191 = vpop.f32.mrb[0].mxu0
      %v1192 = vpop.f32.mrb[0].mxu0
      %v1193 = vadd.f32 %v1048, %v1192
      %v1194 = vpop.f32.mrb[0].mxu0
      %1195 = vmatprep.mubr.bf16.mxu0 0
      %1196 = vmatmul.mubr.bf16.gmra.mrb[0].mxu0 %v1120
      %v1197 = vpop.f32.mrb[0].mxu0
      %v1198 = vadd.f32 %v1053, %v1197
      %v1199 = vpop.f32.mrb[0].mxu0
      %v1200 = vpop.f32.mrb[0].mxu0
      %v1201 = vadd.f32 %v1056, %v1200
      %v1202 = vpop.f32.mrb[0].mxu0
      %1203 = vmatprep.mubr.bf16.mxu0 0
      %1204 = vmatmul.mubr.bf16.gmra.mrb[0].mxu0 %v1123
      %v1205 = vpop.f32.mrb[0].mxu0
      %v1206 = vadd.f32 %v1061, %v1205
      %v1207 = vpop.f32.mrb[0].mxu0
      %v1208 = vpop.f32.mrb[0].mxu0
      %v1209 = vadd.f32 %v1064, %v1208
      %v1210 = vpop.f32.mrb[0].mxu0
      %1211 = vmatprep.mubr.bf16.mxu0 0
      %1212 = vmatmul.mubr.bf16.gmra.mrb[0].mxu0 %v1126
      %v1213 = vpop.f32.mrb[0].mxu0
      %v1214 = vadd.f32 %v1069, %v1213
      %v1215 = vpop.f32.mrb[0].mxu0
      %v1216 = vpop.f32.mrb[0].mxu0
      %v1217 = vadd.f32 %v1072, %v1216
      %v1218 = vpop.f32.mrb[0].mxu0
      %1219 = vmatprep.mubr.bf16.mxu0 0
      %1220 = vmatmul.mubr.bf16.gmra.mrb[0].mxu0 %v1129
      %v1221 = vpop.f32.mrb[0].mxu0
      %v1222 = vadd.f32 %v1077, %v1221
      %v1223 = vpop.f32.mrb[0].mxu0
      %v1224 = vpop.f32.mrb[0].mxu0
      %v1225 = vadd.f32 %v1080, %v1224
      %v1226 = vpop.f32.mrb[0].mxu0
      %1227 = vdwg.mxu0
      %s1228 = scalar_lea.vmem %s2, 64
      %v1229 = vld [vmem:[%s1228] sm:$0xf]
      %v1230 = vld [vmem:[%s1228 + $0x4] sm:$0xf]
      %v1231 = vld [vmem:[%s1228 + $0x8] sm:$0xf]
      %v1232 = vld [vmem:[%s1228 + $0xc] sm:$0xf]
      %v1233 = vld [vmem:[%s1228 + $0x10] sm:$0xf]
      %v1234 = vld [vmem:[%s1228 + $0x14] sm:$0xf]
      %v1235 = vld [vmem:[%s1228 + $0x18] sm:$0xf]
      %v1236 = vld [vmem:[%s1228 + $0x1c] sm:$0xf]
      %v1245 = vunpack.c.l.b16 %v1229
      %v1246 = vunpack.c.l.b16 %v1230
      %v1247 = vunpack.c.l.b16 %v1231
      %v1248 = vunpack.c.l.b16 %v1232
      %v1249 = vunpack.c.l.b16 %v1233
      %v1250 = vunpack.c.l.b16 %v1234
      %v1251 = vunpack.c.l.b16 %v1235
      %v1252 = vunpack.c.l.b16 %v1236
      %v1253 = vpack.c.b16 %v1246, %v1245
      %v1254 = vpack.c.b16 %v1248, %v1247
      %v1255 = vpack.c.b16 %v1250, %v1249
      %v1256 = vpack.c.b16 %v1252, %v1251
      %v1262 = vsel %vm961, %v912, 0
      %v1265 = vsel %vm961, %v913, 0
      %v1268 = vsel %vm961, %v914, 0
      %v1271 = vsel %vm961, %v915, 0
      %v1274 = vsel %vm961, %v916, 0
      %v1277 = vsel %vm961, %v917, 0
      %v1280 = vsel %vm961, %v918, 0
      %v1283 = vsel %vm961, %v919, 0
      %1285 = vmatprep.subr.bf16.mxu0 0
      %1286 = vmatpush1.bf16.msra.mxu0 %v1253
      %1287 = vmatprep.subr.bf16.mxu0 0
      %1288 = vmatpush1.bf16.msra.mxu0 %v1254
      %1289 = vmatprep.subr.bf16.mxu0 0
      %1290 = vmatpush1.bf16.msra.mxu0 %v1255
      %1291 = vmatprep.subr.bf16.mxu0 0
      %1292 = vmatpush1.bf16.msra.mxu0 %v1256
      %1293 = vmatprep.subr.bf16.mxu0 0
      %1294 = vmatpush1.bf16.msra.mxu0 0
      %1295 = vmatprep.subr.bf16.mxu0 0
      %1296 = vmatpush1.bf16.msra.mxu0 0
      %1297 = vmatprep.subr.bf16.mxu0 0
      %1298 = vmatpush1.bf16.msra.mxu0 0
      %1299 = vmatprep.subr.bf16.mxu0 0
      %1300 = vmatpush1.bf16.msra.mxu0 0
      %1301 = vmatprep.subr.bf16.mxu0 0
      %1302 = vmatpush1.bf16.msra.mxu0 0
      %1303 = vmatprep.subr.bf16.mxu0 0
      %1304 = vmatpush1.bf16.msra.mxu0 0
      %1305 = vmatprep.subr.bf16.mxu0 0
      %1306 = vmatpush1.bf16.msra.mxu0 0
      %1307 = vmatprep.subr.bf16.mxu0 0
      %1308 = vmatpush1.bf16.msra.mxu0 0
      %1309 = vmatprep.subr.bf16.mxu0 0
      %1310 = vmatpush1.bf16.msra.mxu0 0
      %1311 = vmatprep.subr.bf16.mxu0 0
      %1312 = vmatpush1.bf16.msra.mxu0 0
      %1313 = vmatprep.subr.bf16.mxu0 0
      %1314 = vmatpush1.bf16.msra.mxu0 0
      %1315 = vmatprep.subr.bf16.mxu0 0
      %1316 = vmatpush1.bf16.msra.mxu0 0
      %1317 = vmatprep.mubr.bf16.mxu0 0
      %1318 = vmatmul.mubr.bf16.gmra.mrb[0].mxu0 %v1262
      %v1319 = vpop.f32.mrb[0].mxu0
      %v1320 = vadd.f32 0.0, %v1319
      %v1321 = vpop.f32.mrb[0].mxu0
      %v1322 = vpop.f32.mrb[0].mxu0
      %v1323 = vadd.f32 0.0, %v1322
      %v1324 = vpop.f32.mrb[0].mxu0
      %1325 = vmatprep.mubr.bf16.mxu0 0
      %1326 = vmatmul.mubr.bf16.gmra.mrb[0].mxu0 %v1265
      %v1327 = vpop.f32.mrb[0].mxu0
      %v1328 = vadd.f32 0.0, %v1327
      %v1329 = vpop.f32.mrb[0].mxu0
      %v1330 = vpop.f32.mrb[0].mxu0
      %v1331 = vadd.f32 0.0, %v1330
      %v1332 = vpop.f32.mrb[0].mxu0
      %1333 = vmatprep.mubr.bf16.mxu0 0
      %1334 = vmatmul.mubr.bf16.gmra.mrb[0].mxu0 %v1268
      %v1335 = vpop.f32.mrb[0].mxu0
      %v1336 = vadd.f32 0.0, %v1335
      %v1337 = vpop.f32.mrb[0].mxu0
      %v1338 = vpop.f32.mrb[0].mxu0
      %v1339 = vadd.f32 0.0, %v1338
      %v1340 = vpop.f32.mrb[0].mxu0
      %1341 = vmatprep.mubr.bf16.mxu0 0
      %1342 = vmatmul.mubr.bf16.gmra.mrb[0].mxu0 %v1271
      %v1343 = vpop.f32.mrb[0].mxu0
      %v1344 = vadd.f32 0.0, %v1343
      %v1345 = vpop.f32.mrb[0].mxu0
      %v1346 = vpop.f32.mrb[0].mxu0
      %v1347 = vadd.f32 0.0, %v1346
      %v1348 = vpop.f32.mrb[0].mxu0
      %1349 = vmatprep.mubr.bf16.mxu0 0
      %1350 = vmatmul.mubr.bf16.gmra.mrb[0].mxu0 %v1274
      %v1351 = vpop.f32.mrb[0].mxu0
      %v1352 = vadd.f32 0.0, %v1351
      %v1353 = vpop.f32.mrb[0].mxu0
      %v1354 = vpop.f32.mrb[0].mxu0
      %v1355 = vadd.f32 0.0, %v1354
      %v1356 = vpop.f32.mrb[0].mxu0
      %1357 = vmatprep.mubr.bf16.mxu0 0
      %1358 = vmatmul.mubr.bf16.gmra.mrb[0].mxu0 %v1277
      %v1359 = vpop.f32.mrb[0].mxu0
      %v1360 = vadd.f32 0.0, %v1359
      %v1361 = vpop.f32.mrb[0].mxu0
      %v1362 = vpop.f32.mrb[0].mxu0
      %v1363 = vadd.f32 0.0, %v1362
      %v1364 = vpop.f32.mrb[0].mxu0
      %1365 = vmatprep.mubr.bf16.mxu0 0
      %1366 = vmatmul.mubr.bf16.gmra.mrb[0].mxu0 %v1280
      %v1367 = vpop.f32.mrb[0].mxu0
      %v1368 = vadd.f32 0.0, %v1367
      %v1369 = vpop.f32.mrb[0].mxu0
      %v1370 = vpop.f32.mrb[0].mxu0
      %v1371 = vadd.f32 0.0, %v1370
      %v1372 = vpop.f32.mrb[0].mxu0
      %1373 = vmatprep.mubr.bf16.mxu0 0
      %1374 = vmatmul.mubr.bf16.gmra.mrb[0].mxu0 %v1283
      %v1375 = vpop.f32.mrb[0].mxu0
      %v1376 = vadd.f32 0.0, %v1375
      %v1377 = vpop.f32.mrb[0].mxu0
      %v1378 = vpop.f32.mrb[0].mxu0
      %v1379 = vadd.f32 0.0, %v1378
      %v1380 = vpop.f32.mrb[0].mxu0
      %1381 = vdwg.mxu0
      %v1382 = vadd.f32 %v1166, %v1320
      %v1383 = vadd.f32 %v1169, %v1323
      %v1384 = vadd.f32 %v1174, %v1328
      %v1385 = vadd.f32 %v1177, %v1331
      %v1386 = vadd.f32 %v1182, %v1336
      %v1387 = vadd.f32 %v1185, %v1339
      %v1388 = vadd.f32 %v1190, %v1344
      %v1389 = vadd.f32 %v1193, %v1347
      %v1390 = vadd.f32 %v1198, %v1352
      %v1391 = vadd.f32 %v1201, %v1355
      %v1392 = vadd.f32 %v1206, %v1360
      %v1393 = vadd.f32 %v1209, %v1363
      %v1394 = vadd.f32 %v1214, %v1368
      %v1395 = vadd.f32 %v1217, %v1371
      %v1396 = vadd.f32 %v1222, %v1376
      %v1397 = vadd.f32 %v1225, %v1379
      %v1398 = vld [vmem:[%s4 + $0x2] ss:$0 sm:$0xff]
      %v1399 = vmul.f32 %v1382, %v1398
      %v1400 = vmul.f32 %v1383, %v1398
      %v1401 = vmul.f32 %v1384, %v1398
      %v1402 = vmul.f32 %v1385, %v1398
      %v1403 = vmul.f32 %v1386, %v1398
      %v1404 = vmul.f32 %v1387, %v1398
      %v1405 = vmul.f32 %v1388, %v1398
      %v1406 = vmul.f32 %v1389, %v1398
      %v1407 = vmul.f32 %v1390, %v1398
      %v1408 = vmul.f32 %v1391, %v1398
      %v1409 = vmul.f32 %v1392, %v1398
      %v1410 = vmul.f32 %v1393, %v1398
      %v1411 = vmul.f32 %v1394, %v1398
      %v1412 = vmul.f32 %v1395, %v1398
      %v1413 = vmul.f32 %v1396, %v1398
      %v1414 = vmul.f32 %v1397, %v1398
      %v1415 = vld [vmem:[%s4 + $0x3] ss:$0 sm:$0xff]
      %v1416 = vadd.f32 %v1399, %v1415
      %v1417 = vadd.f32 %v1400, %v1415
      %v1418 = vadd.f32 %v1401, %v1415
      %v1419 = vadd.f32 %v1402, %v1415
      %v1420 = vadd.f32 %v1403, %v1415
      %v1421 = vadd.f32 %v1404, %v1415
      %v1422 = vadd.f32 %v1405, %v1415
      %v1423 = vadd.f32 %v1406, %v1415
      %v1424 = vadd.f32 %v1407, %v1415
      %v1425 = vadd.f32 %v1408, %v1415
      %v1426 = vadd.f32 %v1409, %v1415
      %v1427 = vadd.f32 %v1410, %v1415
      %v1428 = vadd.f32 %v1411, %v1415
      %v1429 = vadd.f32 %v1412, %v1415
      %v1430 = vadd.f32 %v1413, %v1415
      %v1431 = vadd.f32 %v1414, %v1415
      %v1432 = vmax.f32 %v1416, 0.0
      %v1433 = vmax.f32 %v1417, 0.0
      %v1434 = vmax.f32 %v1418, 0.0
      %v1435 = vmax.f32 %v1419, 0.0
      %v1436 = vmax.f32 %v1420, 0.0
      %v1437 = vmax.f32 %v1421, 0.0
      %v1438 = vmax.f32 %v1422, 0.0
      %v1439 = vmax.f32 %v1423, 0.0
      %v1440 = vmax.f32 %v1424, 0.0
      %v1441 = vmax.f32 %v1425, 0.0
      %v1442 = vmax.f32 %v1426, 0.0
      %v1443 = vmax.f32 %v1427, 0.0
      %v1444 = vmax.f32 %v1428, 0.0
      %v1445 = vmax.f32 %v1429, 0.0
      %v1446 = vmax.f32 %v1430, 0.0
      %v1447 = vmax.f32 %v1431, 0.0
      %v1448 = vpack.c.bf16 %v1433, %v1432
      %v1449 = vpack.c.bf16 %v1435, %v1434
      %v1450 = vpack.c.bf16 %v1437, %v1436
      %v1451 = vpack.c.bf16 %v1439, %v1438
      %v1452 = vpack.c.bf16 %v1441, %v1440
      %v1453 = vpack.c.bf16 %v1443, %v1442
      %v1454 = vpack.c.bf16 %v1445, %v1444
      %v1455 = vpack.c.bf16 %v1447, %v1446
      %v1456 = vld [vmem:[%s3] sm:$0xff]
      %v1457 = vld [vmem:[%s3 + $0x8] sm:$0xff]
      %v1458 = vld [vmem:[%s3 + $0x10] sm:$0xff]
      %v1459 = vld [vmem:[%s3 + $0x18] sm:$0xff]
      %v1460 = vld [vmem:[%s3 + $0x20] sm:$0xff]
      %v1461 = vld [vmem:[%s3 + $0x28] sm:$0xff]
      %v1462 = vld [vmem:[%s3 + $0x30] sm:$0xff]
      %v1463 = vld [vmem:[%s3 + $0x38] sm:$0xff]
      %v1472 = vunpack.c.l.b16 %v1456
      %v1473 = vunpack.c.h.b16 %v1456
      %v1474 = vunpack.c.l.b16 %v1457
      %v1475 = vunpack.c.h.b16 %v1457
      %v1476 = vunpack.c.l.b16 %v1458
      %v1477 = vunpack.c.h.b16 %v1458
      %v1478 = vunpack.c.l.b16 %v1459
      %v1479 = vunpack.c.h.b16 %v1459
      %v1480 = vunpack.c.l.b16 %v1460
      %v1481 = vunpack.c.h.b16 %v1460
      %v1482 = vunpack.c.l.b16 %v1461
      %v1483 = vunpack.c.h.b16 %v1461
      %v1484 = vunpack.c.l.b16 %v1462
      %v1485 = vunpack.c.h.b16 %v1462
      %v1486 = vunpack.c.l.b16 %v1463
      %v1487 = vunpack.c.h.b16 %v1463
      %v1488 = vpack.c.b16 %v1474, %v1472
      %v1489 = vpack.c.b16 %v1475, %v1473
      %v1490 = vpack.c.b16 %v1478, %v1476
      %v1491 = vpack.c.b16 %v1479, %v1477
      %v1492 = vpack.c.b16 %v1482, %v1480
      %v1493 = vpack.c.b16 %v1483, %v1481
      %v1494 = vpack.c.b16 %v1486, %v1484
      %v1495 = vpack.c.b16 %v1487, %v1485
      %v1505 = vsel %vm961, %v1448, 0
      %v1508 = vsel %vm961, %v1449, 0
      %v1511 = vsel %vm961, %v1450, 0
      %v1514 = vsel %vm961, %v1451, 0
      %v1517 = vsel %vm961, %v1452, 0
      %v1520 = vsel %vm961, %v1453, 0
      %v1523 = vsel %vm961, %v1454, 0
      %v1526 = vsel %vm961, %v1455, 0
      %1528 = vmatprep.subr.bf16.mxu0 %v1489
      %1529 = vmatpush1.bf16.msra.mxu0 %v1488
      %1530 = vmatprep.subr.bf16.mxu0 %v1491
      %1531 = vmatpush1.bf16.msra.mxu0 %v1490
      %1532 = vmatprep.subr.bf16.mxu0 %v1493
      %1533 = vmatpush1.bf16.msra.mxu0 %v1492
      %1534 = vmatprep.subr.bf16.mxu0 %v1495
      %1535 = vmatpush1.bf16.msra.mxu0 %v1494
      %1536 = vmatprep.subr.bf16.mxu0 0
      %1537 = vmatpush1.bf16.msra.mxu0 0
      %1538 = vmatprep.subr.bf16.mxu0 0
      %1539 = vmatpush1.bf16.msra.mxu0 0
      %1540 = vmatprep.subr.bf16.mxu0 0
      %1541 = vmatpush1.bf16.msra.mxu0 0
      %1542 = vmatprep.subr.bf16.mxu0 0
      %1543 = vmatpush1.bf16.msra.mxu0 0
      %1544 = vmatprep.subr.bf16.mxu0 0
      %1545 = vmatpush1.bf16.msra.mxu0 0
      %1546 = vmatprep.subr.bf16.mxu0 0
      %1547 = vmatpush1.bf16.msra.mxu0 0
      %1548 = vmatprep.subr.bf16.mxu0 0
      %1549 = vmatpush1.bf16.msra.mxu0 0
      %1550 = vmatprep.subr.bf16.mxu0 0
      %1551 = vmatpush1.bf16.msra.mxu0 0
      %1552 = vmatprep.subr.bf16.mxu0 0
      %1553 = vmatpush1.bf16.msra.mxu0 0
      %1554 = vmatprep.subr.bf16.mxu0 0
      %1555 = vmatpush1.bf16.msra.mxu0 0
      %1556 = vmatprep.subr.bf16.mxu0 0
      %1557 = vmatpush1.bf16.msra.mxu0 0
      %1558 = vmatprep.subr.bf16.mxu0 0
      %1559 = vmatpush1.bf16.msra.mxu0 0
      %1560 = vmatprep.mubr.bf16.mxu0 0
      %1561 = vmatmul.mubr.bf16.gmra.mrb[0].mxu0 %v1505
      %v1562 = vpop.f32.mrb[0].mxu0
      %v1563 = vadd.f32 0.0, %v1562
      %v1564 = vpop.f32.mrb[0].mxu0
      %v1565 = vadd.f32 0.0, %v1564
      %v1566 = vpop.f32.mrb[0].mxu0
      %v1567 = vadd.f32 0.0, %v1566
      %v1568 = vpop.f32.mrb[0].mxu0
      %v1569 = vadd.f32 0.0, %v1568
      %1570 = vmatprep.mubr.bf16.mxu0 0
      %1571 = vmatmul.mubr.bf16.gmra.mrb[0].mxu0 %v1508
      %v1572 = vpop.f32.mrb[0].mxu0
      %v1573 = vadd.f32 0.0, %v1572
      %v1574 = vpop.f32.mrb[0].mxu0
      %v1575 = vadd.f32 0.0, %v1574
      %v1576 = vpop.f32.mrb[0].mxu0
      %v1577 = vadd.f32 0.0, %v1576
      %v1578 = vpop.f32.mrb[0].mxu0
      %v1579 = vadd.f32 0.0, %v1578
      %1580 = vmatprep.mubr.bf16.mxu0 0
      %1581 = vmatmul.mubr.bf16.gmra.mrb[0].mxu0 %v1511
      %v1582 = vpop.f32.mrb[0].mxu0
      %v1583 = vadd.f32 0.0, %v1582
      %v1584 = vpop.f32.mrb[0].mxu0
      %v1585 = vadd.f32 0.0, %v1584
      %v1586 = vpop.f32.mrb[0].mxu0
      %v1587 = vadd.f32 0.0, %v1586
      %v1588 = vpop.f32.mrb[0].mxu0
      %v1589 = vadd.f32 0.0, %v1588
      %1590 = vmatprep.mubr.bf16.mxu0 0
      %1591 = vmatmul.mubr.bf16.gmra.mrb[0].mxu0 %v1514
      %v1592 = vpop.f32.mrb[0].mxu0
      %v1593 = vadd.f32 0.0, %v1592
      %v1594 = vpop.f32.mrb[0].mxu0
      %v1595 = vadd.f32 0.0, %v1594
      %v1596 = vpop.f32.mrb[0].mxu0
      %v1597 = vadd.f32 0.0, %v1596
      %v1598 = vpop.f32.mrb[0].mxu0
      %v1599 = vadd.f32 0.0, %v1598
      %1600 = vmatprep.mubr.bf16.mxu0 0
      %1601 = vmatmul.mubr.bf16.gmra.mrb[0].mxu0 %v1517
      %v1602 = vpop.f32.mrb[0].mxu0
      %v1603 = vadd.f32 0.0, %v1602
      %v1604 = vpop.f32.mrb[0].mxu0
      %v1605 = vadd.f32 0.0, %v1604
      %v1606 = vpop.f32.mrb[0].mxu0
      %v1607 = vadd.f32 0.0, %v1606
      %v1608 = vpop.f32.mrb[0].mxu0
      %v1609 = vadd.f32 0.0, %v1608
      %1610 = vmatprep.mubr.bf16.mxu0 0
      %1611 = vmatmul.mubr.bf16.gmra.mrb[0].mxu0 %v1520
      %v1612 = vpop.f32.mrb[0].mxu0
      %v1613 = vadd.f32 0.0, %v1612
      %v1614 = vpop.f32.mrb[0].mxu0
      %v1615 = vadd.f32 0.0, %v1614
      %v1616 = vpop.f32.mrb[0].mxu0
      %v1617 = vadd.f32 0.0, %v1616
      %v1618 = vpop.f32.mrb[0].mxu0
      %v1619 = vadd.f32 0.0, %v1618
      %1620 = vmatprep.mubr.bf16.mxu0 0
      %1621 = vmatmul.mubr.bf16.gmra.mrb[0].mxu0 %v1523
      %v1622 = vpop.f32.mrb[0].mxu0
      %v1623 = vadd.f32 0.0, %v1622
      %v1624 = vpop.f32.mrb[0].mxu0
      %v1625 = vadd.f32 0.0, %v1624
      %v1626 = vpop.f32.mrb[0].mxu0
      %v1627 = vadd.f32 0.0, %v1626
      %v1628 = vpop.f32.mrb[0].mxu0
      %v1629 = vadd.f32 0.0, %v1628
      %1630 = vmatprep.mubr.bf16.mxu0 0
      %1631 = vmatmul.mubr.bf16.gmra.mrb[0].mxu0 %v1526
      %v1632 = vpop.f32.mrb[0].mxu0
      %v1633 = vadd.f32 0.0, %v1632
      %v1634 = vpop.f32.mrb[0].mxu0
      %v1635 = vadd.f32 0.0, %v1634
      %v1636 = vpop.f32.mrb[0].mxu0
      %v1637 = vadd.f32 0.0, %v1636
      %v1638 = vpop.f32.mrb[0].mxu0
      %v1639 = vadd.f32 0.0, %v1638
      %1640 = vdwg.mxu0
      %s1641 = scalar_lea.vmem %s4, 4
      %v1642 = vld [vmem:[%s1641] ss:$8 sm:$0x3]
      %v1644 = vlaneseq
      %v1645 = vshrl.u32 %v1644, 7
      %v1646 = vsub.s32 0, %v1645
      %v1647 = vrot.slane %v1642, %v1646
      %v1648 = vlaneseq
      %v1649 = vshrl.u32 %v1648, 7
      %v1650 = vsub.s32 1, %v1649
      %v1651 = vrot.slane %v1642, %v1650
      %v1654 = vmul.f32 %v1563, %v1647
      %v1655 = vmul.f32 %v1565, %v1651
      %v1656 = vmul.f32 %v1567, %v1647
      %v1657 = vmul.f32 %v1569, %v1651
      %v1658 = vmul.f32 %v1573, %v1647
      %v1659 = vmul.f32 %v1575, %v1651
      %v1660 = vmul.f32 %v1577, %v1647
      %v1661 = vmul.f32 %v1579, %v1651
      %v1662 = vmul.f32 %v1583, %v1647
      %v1663 = vmul.f32 %v1585, %v1651
      %v1664 = vmul.f32 %v1587, %v1647
      %v1665 = vmul.f32 %v1589, %v1651
      %v1666 = vmul.f32 %v1593, %v1647
      %v1667 = vmul.f32 %v1595, %v1651
      %v1668 = vmul.f32 %v1597, %v1647
      %v1669 = vmul.f32 %v1599, %v1651
      %v1670 = vmul.f32 %v1603, %v1647
      %v1671 = vmul.f32 %v1605, %v1651
      %v1672 = vmul.f32 %v1607, %v1647
      %v1673 = vmul.f32 %v1609, %v1651
      %v1674 = vmul.f32 %v1613, %v1647
      %v1675 = vmul.f32 %v1615, %v1651
      %v1676 = vmul.f32 %v1617, %v1647
      %v1677 = vmul.f32 %v1619, %v1651
      %v1678 = vmul.f32 %v1623, %v1647
      %v1679 = vmul.f32 %v1625, %v1651
      %v1680 = vmul.f32 %v1627, %v1647
      %v1681 = vmul.f32 %v1629, %v1651
      %v1682 = vmul.f32 %v1633, %v1647
      %v1683 = vmul.f32 %v1635, %v1651
      %v1684 = vmul.f32 %v1637, %v1647
      %v1685 = vmul.f32 %v1639, %v1651
      %s1686 = scalar_lea.vmem %s4, 5
      %v1687 = vld [vmem:[%s1686] ss:$8 sm:$0x3]
      %v1689 = vlaneseq
      %v1690 = vshrl.u32 %v1689, 7
      %v1691 = vsub.s32 0, %v1690
      %v1692 = vrot.slane %v1687, %v1691
      %v1693 = vlaneseq
      %v1694 = vshrl.u32 %v1693, 7
      %v1695 = vsub.s32 1, %v1694
      %v1696 = vrot.slane %v1687, %v1695
      %v1699 = vadd.f32 %v1654, %v1692
      %v1700 = vadd.f32 %v1655, %v1696
      %v1701 = vadd.f32 %v1656, %v1692
      %v1702 = vadd.f32 %v1657, %v1696
      %v1703 = vadd.f32 %v1658, %v1692
      %v1704 = vadd.f32 %v1659, %v1696
      %v1705 = vadd.f32 %v1660, %v1692
      %v1706 = vadd.f32 %v1661, %v1696
      %v1707 = vadd.f32 %v1662, %v1692
      %v1708 = vadd.f32 %v1663, %v1696
      %v1709 = vadd.f32 %v1664, %v1692
      %v1710 = vadd.f32 %v1665, %v1696
      %v1711 = vadd.f32 %v1666, %v1692
      %v1712 = vadd.f32 %v1667, %v1696
      %v1713 = vadd.f32 %v1668, %v1692
      %v1714 = vadd.f32 %v1669, %v1696
      %v1715 = vadd.f32 %v1670, %v1692
      %v1716 = vadd.f32 %v1671, %v1696
      %v1717 = vadd.f32 %v1672, %v1692
      %v1718 = vadd.f32 %v1673, %v1696
      %v1719 = vadd.f32 %v1674, %v1692
      %v1720 = vadd.f32 %v1675, %v1696
      %v1721 = vadd.f32 %v1676, %v1692
      %v1722 = vadd.f32 %v1677, %v1696
      %v1723 = vadd.f32 %v1678, %v1692
      %v1724 = vadd.f32 %v1679, %v1696
      %v1725 = vadd.f32 %v1680, %v1692
      %v1726 = vadd.f32 %v1681, %v1696
      %v1727 = vadd.f32 %v1682, %v1692
      %v1728 = vadd.f32 %v1683, %v1696
      %v1729 = vadd.f32 %v1684, %v1692
      %v1730 = vadd.f32 %v1685, %v1696
      %v1731 = vadd.f32 %v1699, %v234
      %v1732 = vadd.f32 %v1700, %v235
      %v1733 = vadd.f32 %v1701, %v236
      %v1734 = vadd.f32 %v1702, %v237
      %v1735 = vadd.f32 %v1703, %v238
      %v1736 = vadd.f32 %v1704, %v239
      %v1737 = vadd.f32 %v1705, %v240
      %v1738 = vadd.f32 %v1706, %v241
      %v1739 = vadd.f32 %v1707, %v242
      %v1740 = vadd.f32 %v1708, %v243
      %v1741 = vadd.f32 %v1709, %v244
      %v1742 = vadd.f32 %v1710, %v245
      %v1743 = vadd.f32 %v1711, %v246
      %v1744 = vadd.f32 %v1712, %v247
      %v1745 = vadd.f32 %v1713, %v248
      %v1746 = vadd.f32 %v1714, %v249
      %v1747 = vadd.f32 %v1715, %v250
      %v1748 = vadd.f32 %v1716, %v251
      %v1749 = vadd.f32 %v1717, %v252
      %v1750 = vadd.f32 %v1718, %v253
      %v1751 = vadd.f32 %v1719, %v254
      %v1752 = vadd.f32 %v1720, %v255
      %v1753 = vadd.f32 %v1721, %v256
      %v1754 = vadd.f32 %v1722, %v257
      %v1755 = vadd.f32 %v1723, %v258
      %v1756 = vadd.f32 %v1724, %v259
      %v1757 = vadd.f32 %v1725, %v260
      %v1758 = vadd.f32 %v1726, %v261
      %v1759 = vadd.f32 %v1727, %v262
      %v1760 = vadd.f32 %v1728, %v263
      %v1761 = vadd.f32 %v1729, %v264
      %v1762 = vadd.f32 %v1730, %v265
      %v1763 = vmax.f32 %v1731, 0.0
      %v1764 = vmax.f32 %v1732, 0.0
      %v1765 = vmax.f32 %v1733, 0.0
      %v1766 = vmax.f32 %v1734, 0.0
      %v1767 = vmax.f32 %v1735, 0.0
      %v1768 = vmax.f32 %v1736, 0.0
      %v1769 = vmax.f32 %v1737, 0.0
      %v1770 = vmax.f32 %v1738, 0.0
      %v1771 = vmax.f32 %v1739, 0.0
      %v1772 = vmax.f32 %v1740, 0.0
      %v1773 = vmax.f32 %v1741, 0.0
      %v1774 = vmax.f32 %v1742, 0.0
      %v1775 = vmax.f32 %v1743, 0.0
      %v1776 = vmax.f32 %v1744, 0.0
      %v1777 = vmax.f32 %v1745, 0.0
      %v1778 = vmax.f32 %v1746, 0.0
      %v1779 = vmax.f32 %v1747, 0.0
      %v1780 = vmax.f32 %v1748, 0.0
      %v1781 = vmax.f32 %v1749, 0.0
      %v1782 = vmax.f32 %v1750, 0.0
      %v1783 = vmax.f32 %v1751, 0.0
      %v1784 = vmax.f32 %v1752, 0.0
      %v1785 = vmax.f32 %v1753, 0.0
      %v1786 = vmax.f32 %v1754, 0.0
      %v1787 = vmax.f32 %v1755, 0.0
      %v1788 = vmax.f32 %v1756, 0.0
      %v1789 = vmax.f32 %v1757, 0.0
      %v1790 = vmax.f32 %v1758, 0.0
      %v1791 = vmax.f32 %v1759, 0.0
      %v1792 = vmax.f32 %v1760, 0.0
      %v1793 = vmax.f32 %v1761, 0.0
      %v1794 = vmax.f32 %v1762, 0.0
      %1795 = vst [vmem:[%s231] sm:$0xff] %v1763
      %1796 = vst [vmem:[%s231 + $0x8] sm:$0xff] %v1764
      %1797 = vst [vmem:[%s231 + $0x10] sm:$0xff] %v1765
      %1798 = vst [vmem:[%s231 + $0x18] sm:$0xff] %v1766
      %1799 = vst [vmem:[%s231 + $0x20] sm:$0xff] %v1767
      %1800 = vst [vmem:[%s231 + $0x28] sm:$0xff] %v1768
      %1801 = vst [vmem:[%s231 + $0x30] sm:$0xff] %v1769
      %1802 = vst [vmem:[%s231 + $0x38] sm:$0xff] %v1770
      %1803 = vst [vmem:[%s231 + $0x40] sm:$0xff] %v1771
      %1804 = vst [vmem:[%s231 + $0x48] sm:$0xff] %v1772
      %1805 = vst [vmem:[%s231 + $0x50] sm:$0xff] %v1773
      %1806 = vst [vmem:[%s231 + $0x58] sm:$0xff] %v1774
      %1807 = vst [vmem:[%s231 + $0x60] sm:$0xff] %v1775
      %1808 = vst [vmem:[%s231 + $0x68] sm:$0xff] %v1776
      %1809 = vst [vmem:[%s231 + $0x70] sm:$0xff] %v1777
      %1810 = vst [vmem:[%s231 + $0x78] sm:$0xff] %v1778
      %1811 = vst [vmem:[%s231 + $0x80] sm:$0xff] %v1779
      %1812 = vst [vmem:[%s231 + $0x88] sm:$0xff] %v1780
      %1813 = vst [vmem:[%s231 + $0x90] sm:$0xff] %v1781
      %1814 = vst [vmem:[%s231 + $0x98] sm:$0xff] %v1782
      %1815 = vst [vmem:[%s231 + $0xa0] sm:$0xff] %v1783
      %1816 = vst [vmem:[%s231 + $0xa8] sm:$0xff] %v1784
      %1817 = vst [vmem:[%s231 + $0xb0] sm:$0xff] %v1785
      %1818 = vst [vmem:[%s231 + $0xb8] sm:$0xff] %v1786
      %1819 = vst [vmem:[%s231 + $0xc0] sm:$0xff] %v1787
      %1820 = vst [vmem:[%s231 + $0xc8] sm:$0xff] %v1788
      %1821 = vst [vmem:[%s231 + $0xd0] sm:$0xff] %v1789
      %1822 = vst [vmem:[%s231 + $0xd8] sm:$0xff] %v1790
      %1823 = vst [vmem:[%s231 + $0xe0] sm:$0xff] %v1791
      %1824 = vst [vmem:[%s231 + $0xe8] sm:$0xff] %v1792
      %1825 = vst [vmem:[%s231 + $0xf0] sm:$0xff] %v1793
      %1826 = vst [vmem:[%s231 + $0xf8] sm:$0xff] %v1794
      %s1827 = smul.u32 16, %s16
      %p1828 = scmp.lt.s32.totalorder %s1827, 31
      %s1829 = scalar_select %p1828, %s1827, 31
      %s1830 = smul.addr %s1829, 2
      %s1831 = smul.addr %s1830, 8
      %s1832 = scalar_lea.vmem %s5, %s1831
      // Predicated region
      $region41: #{bottleneck_pallas.1} parent=39 // pred_check
        %p1833 = pneg %p144
      $region42: #{bottleneck_pallas.1} parent=39 // pred_check_branch
        %1835 = sbr.rel (%p1833) target = $region44
      $region43: #{bottleneck_pallas.1} parent=39 // pred_region
        %s1836 = smul.u32 16, %s16
      $region44: #{bottleneck_pallas.1} parent=39 // pred_fallthru
        _
    $region40: #{bottleneck_pallas.1} parent=5 // pred_fallthru
      _
    %p1837 = scmp.le.s32.totalorder 2, %s11
    // Predicated region
    $region45: #{bottleneck_pallas.1} parent=5 // pred_check
      %p1838 = pneg %p1837
    $region46: #{bottleneck_pallas.1} parent=5 // pred_check_branch
      %1840 = sbr.rel (%p1838) target = $region48
    $region47: #{bottleneck_pallas.1} parent=5 // pred_region
      %s1841 = ssub.s32 %s11, 2
      // Predicated region
      $region49: #{bottleneck_pallas.1} parent=47 // pred_check
        %p1842 = pneg %p150
      $region50: #{bottleneck_pallas.1} parent=47 // pred_check_branch
        %1844 = sbr.rel (%p1842) target = $region52
      $region51: #{bottleneck_pallas.1} parent=47 // pred_region
        %s1845 = smul.u32 16, %s17
        %p1846 = scmp.lt.s32.totalorder %s1845, 31
        %s1847 = scalar_select %p1846, %s1845, 31
        %s1848 = smul.addr %s1847, 2
        %s1849 = smul.addr %s1848, 8
        %s1850 = scalar_lea.vmem %s5, %s1849
      $region52: #{bottleneck_pallas.1} parent=47 // pred_fallthru
        _
    $region48: #{bottleneck_pallas.1} parent=5 // pred_fallthru
      _
  $region6: #{bottleneck_pallas.1} parent=0 // loop_footer
    %s15 = sadd.s32 1, %s11
  $region7: #{bottleneck_pallas.1} parent=0 // loop_footer_branch
    %10 = sbr.rel target = $region3
  $region8: #{bottleneck_pallas.1} parent=0 // loop_exit
    _

</llo_original>
